<compile_context>
chip_gen: v6e
topology: v6e:2x2x1
jax: 0.10.0
libtpu: 0.0.40
codegen_flags: <defaults>
</compile_context>

<pallas_src>
import functools

import jax
import jax.numpy as jnp
from jax import lax
from jax.experimental import pallas as pl
from jax.experimental.pallas import tpu as pltpu


def _oa_kernel(x_ref, wq_ref, bk_ref, wv_ref, bv_ref, wt_ref, bt_ref,
               out_ref, k_scr, num_scr, cs_scr, *, tq):
    """One (batch, query-tile) grid step. All tensors are channels-first [C, N]-style."""
    qt = pl.program_id(1)
    n_qt = pl.num_programs(1)

    # ---- per-batch init: cache K (shared q/k weight, bias only on k) + zero accumulators
    @pl.when(qt == 0)
    def _init():
        x_bf = x_ref[...].astype(jnp.bfloat16)                                 # [C, N]
        k = jnp.dot(wq_ref[...], x_bf, preferred_element_type=jnp.float32)
        k = k + bk_ref[...]                                                    # [C4, N]
        k_scr[...] = k.astype(jnp.bfloat16)
        num_scr[...] = jnp.zeros_like(num_scr)
        cs_scr[...] = jnp.zeros_like(cs_scr)

    # ---- this query tile -----------------------------------------------------------
    col0 = pl.multiple_of(qt * tq, tq)
    xt = x_ref[:, pl.ds(col0, tq)].astype(jnp.bfloat16)                        # [C, tq]
    q = jnp.dot(wq_ref[...], xt, preferred_element_type=jnp.float32)           # [C4, tq] (no bias)
    v = jnp.dot(wv_ref[...], xt, preferred_element_type=jnp.float32) + bv_ref[...]  # [C, tq]

    # energy[i, j] = sum_c q[c, i] * k[c, j]
    energy = lax.dot_general(q.astype(jnp.bfloat16), k_scr[...],
                             (((0,), (0,)), ((), ())),
                             preferred_element_type=jnp.float32)               # [tq, N]

    # torch softmax over dim=-1 (per query row), f32, stable
    m = jnp.max(energy, axis=-1, keepdims=True)
    e = jnp.exp(energy - m)
    a = e * pl.reciprocal(jnp.sum(e, axis=-1, keepdims=True), approx=True)     # [tq, N]

    # accumulate x_v @ attention (kept transposed as [C, N]) and per-column sums
    num_scr[...] += jnp.dot(v.astype(jnp.bfloat16), a.astype(jnp.bfloat16),
                            preferred_element_type=jnp.float32)                # [C, N]
    cs_scr[...] += jnp.sum(a, axis=0, keepdims=True)                           # [1, N]

    # ---- finalize: column-normalize, trans-conv + folded BN + ReLU, residual --------
    @pl.when(qt == n_qt - 1)
    def _fin():
        x_f32 = x_ref[...]                                                     # [C, N]
        x_r = num_scr[...] * (1.0 / (1e-9 + cs_scr[...]))                      # [C, N]
        diff = (x_f32 - x_r).astype(jnp.bfloat16)
        t = jnp.dot(wt_ref[...], diff,
                    preferred_element_type=jnp.float32) + bt_ref[...]          # conv + BN folded
        out_ref[...] = x_f32 + jnp.maximum(t, 0.0)


def _choose_tq(n):
    for t in (256, 128, 64, 32, 16, 8):
        if n % t == 0:
            return t
    return n


def oa_attention(x, wq, bk, wv, bv, wt, bt):
    """x [B, C, N] f32; channels-first weights (wq [C/4, C], wv/wt [C, C], biases [*, 1])."""
    B, C, N = x.shape
    C4 = wq.shape[0]
    tq = _choose_tq(N)
    return pl.pallas_call(
        functools.partial(_oa_kernel, tq=tq),
        out_shape=jax.ShapeDtypeStruct((B, C, N), jnp.float32),
        grid_spec=pltpu.PrefetchScalarGridSpec(
            num_scalar_prefetch=0,
            grid=(B, N // tq),
            in_specs=[
                pl.BlockSpec((None, C, N), lambda b, qt: (b, 0, 0)),   # x, resident per batch
                pl.BlockSpec((C4, C), lambda b, qt: (0, 0)),           # shared q/k weight (bf16)
                pl.BlockSpec((C4, 1), lambda b, qt: (0, 0)),           # k bias
                pl.BlockSpec((C, C), lambda b, qt: (0, 0)),            # v weight (bf16)
                pl.BlockSpec((C, 1), lambda b, qt: (0, 0)),            # v bias
                pl.BlockSpec((C, C), lambda b, qt: (0, 0)),            # trans weight * BN scale (bf16)
                pl.BlockSpec((C, 1), lambda b, qt: (0, 0)),            # trans bias folded with BN
            ],
            out_specs=pl.BlockSpec((None, C, N), lambda b, qt: (b, 0, 0)),
            scratch_shapes=[
                pltpu.VMEM((C4, N), jnp.bfloat16),   # cached keys
                pltpu.VMEM((C, N), jnp.float32),     # x_v @ attention accumulator (transposed)
                pltpu.VMEM((1, N), jnp.float32),     # attention column sums
            ],
        ),
        compiler_params=pltpu.CompilerParams(
            dimension_semantics=("parallel", "arbitrary"),
        ),
    )(x, wq, bk, wv, bv, wt, bt)


def init_oa_params(key, channels):
    c4 = channels // 4
    ks = jax.random.split(key, 8)
    wq = jax.random.normal(ks[0], (c4, channels), jnp.float32) / jnp.sqrt(channels)
    bk = 0.05 * jax.random.normal(ks[1], (c4,), jnp.float32)
    wv = jax.random.normal(ks[2], (channels, channels), jnp.float32) / jnp.sqrt(channels)
    bv = 0.05 * jax.random.normal(ks[3], (channels,), jnp.float32)
    wt = jax.random.normal(ks[4], (channels, channels), jnp.float32) / jnp.sqrt(channels)
    bt = 0.05 * jax.random.normal(ks[5], (channels,), jnp.float32)
    gamma = 1.0 + 0.1 * jax.random.normal(ks[6], (channels,), jnp.float32)
    beta = 0.05 * jax.random.normal(ks[7], (channels,), jnp.float32)
    rm = jnp.zeros((channels,), jnp.float32)
    rv = jnp.ones((channels,), jnp.float32)
    return dict(wq=wq, bk=bk, wv=wv, bv=bv, wt=wt, bt=bt,
                gamma=gamma, beta=beta, rm=rm, rv=rv)


def oa_forward(params, x):
    """x: [B, channels, N] (torch NCW) -> [B, channels, N]."""
    eps = 1e-5
    s = params["gamma"] / jnp.sqrt(params["rv"] + eps)          # BN inference scale
    b = params["beta"] - params["rm"] * s                       # BN inference bias
    wt_f = (params["wt"] * s[:, None]).astype(jnp.bfloat16)     # fold BN scale into out-channel rows
    bt_f = (params["bt"] * s + b)[:, None]                      # folded bias, [C, 1]
    wq = params["wq"].astype(jnp.bfloat16)
    wv = params["wv"].astype(jnp.bfloat16)
    bk = params["bk"][:, None]
    bv = params["bv"][:, None]
    return oa_attention(x, wq, bk, wv, bv, wt_f, bt_f)


if __name__ == "__main__":
    B, C, N = 2, 128, 256    # channels=128 as in PCT's offset-attention blocks
    key = jax.random.PRNGKey(0)
    kx, kp = jax.random.split(key)
    x = jax.random.normal(kx, (B, C, N), jnp.float32)
    params = init_oa_params(kp, C)

    out = jax.jit(oa_forward)(params, x)
    jax.block_until_ready(out)

    assert out.shape == (B, C, N)
    assert bool(jnp.all(jnp.isfinite(out)))
    print("KERNEL_OK")
</pallas_src>

<mosaic_0001>
module attributes {stable_mosaic.version = 11 : i64} {
  func.func @_oa_kernel(%arg0: i32, %arg1: i32, %arg2: memref<1x128x256xf32, #tpu.memory_space<vmem>>, %arg3: memref<32x128xbf16, #tpu.memory_space<vmem>>, %arg4: memref<32x1xf32, #tpu.memory_space<vmem>>, %arg5: memref<128x128xbf16, #tpu.memory_space<vmem>>, %arg6: memref<128x1xf32, #tpu.memory_space<vmem>>, %arg7: memref<128x128xbf16, #tpu.memory_space<vmem>>, %arg8: memref<128x1xf32, #tpu.memory_space<vmem>>, %arg9: memref<1x128x256xf32, #tpu.memory_space<vmem>>, %arg10: memref<32x256xbf16, #tpu.memory_space<vmem>>, %arg11: memref<128x256xf32, #tpu.memory_space<vmem>>, %arg12: memref<1x256xf32, #tpu.memory_space<vmem>>) attributes {dimension_semantics = [#tpu.dimension_semantics<parallel>, #tpu.dimension_semantics<arbitrary>], iteration_bounds = array<i64: 2, 1>, scalar_prefetch = 0 : i64, scratch_operands = 3 : i64, tpu.core_type = #tpu.core_type<tc>, window_params = [{transform_indices = @transform_0, window_bounds = array<i64: 1, 128, 256>}, {pipeline_mode = #tpu.pipeline_mode<synchronous>, transform_indices = @transform_1, window_bounds = array<i64: 32, 128>}, {pipeline_mode = #tpu.pipeline_mode<synchronous>, transform_indices = @transform_2, window_bounds = array<i64: 32, 1>}, {pipeline_mode = #tpu.pipeline_mode<synchronous>, transform_indices = @transform_3, window_bounds = array<i64: 128, 128>}, {pipeline_mode = #tpu.pipeline_mode<synchronous>, transform_indices = @transform_4, window_bounds = array<i64: 128, 1>}, {pipeline_mode = #tpu.pipeline_mode<synchronous>, transform_indices = @transform_5, window_bounds = array<i64: 128, 128>}, {pipeline_mode = #tpu.pipeline_mode<synchronous>, transform_indices = @transform_6, window_bounds = array<i64: 128, 1>}, {transform_indices = @transform_7, window_bounds = array<i64: 1, 128, 256>}]} {
    %c0_i32 = arith.constant 0 : i32
    %0 = arith.cmpi eq, %arg1, %c0_i32 : i32
    %1 = arith.extui %0 : i1 to i32
    %c0_i32_0 = arith.constant 0 : i32
    %2 = arith.cmpi ne, %1, %c0_i32_0 : i32
    scf.if %2 {
      %c0_26 = arith.constant 0 : index
      %c0_27 = arith.constant 0 : index
      %c0_28 = arith.constant 0 : index
      %43 = vector.load %arg2[%c0_26, %c0_27, %c0_28] : memref<1x128x256xf32, #tpu.memory_space<vmem>>, vector<1x128x256xf32>
      %44 = vector.shape_cast %43 : vector<1x128x256xf32> to vector<128x256xf32>
      %45 = arith.truncf %44 : vector<128x256xf32> to vector<128x256xbf16>
      %c0_29 = arith.constant 0 : index
      %c0_30 = arith.constant 0 : index
      %46 = vector.load %arg3[%c0_29, %c0_30] : memref<32x128xbf16, #tpu.memory_space<vmem>>, vector<32x128xbf16>
      %cst_31 = arith.constant dense<0.000000e+00> : vector<32x256xf32>
      %47 = tpu.matmul %46, %45, %cst_31 {dimension_numbers = #tpu.dot_dimension_numbers<[1], [0], [0], [1], [0, 0, 1, 1], [], []>} : vector<32x128xbf16>, vector<128x256xbf16>, vector<32x256xf32> -> vector<32x256xf32>
      %c0_32 = arith.constant 0 : index
      %c0_33 = arith.constant 0 : index
      %48 = vector.load %arg4[%c0_32, %c0_33] : memref<32x1xf32, #tpu.memory_space<vmem>>, vector<32x1xf32>
      %49 = vector.broadcast %48 : vector<32x1xf32> to vector<32x256xf32>
      %50 = arith.addf %47, %49 : vector<32x256xf32>
      %51 = arith.truncf %50 : vector<32x256xf32> to vector<32x256xbf16>
      %c0_34 = arith.constant 0 : index
      %c0_35 = arith.constant 0 : index
      %52 = vector.load %arg10[%c0_34, %c0_35] : memref<32x256xbf16, #tpu.memory_space<vmem>>, vector<32x256xbf16>
      tpu.vector_store %arg10[%c0_34, %c0_35], %51 {strides = array<i32>} : memref<32x256xbf16, #tpu.memory_space<vmem>>, vector<32x256xbf16>,
      %cst_36 = arith.constant 0.000000e+00 : f32
      %53 = vector.broadcast %cst_36 : f32 to vector<128x256xf32>
      %c0_37 = arith.constant 0 : index
      %c0_38 = arith.constant 0 : index
      %54 = vector.load %arg11[%c0_37, %c0_38] : memref<128x256xf32, #tpu.memory_space<vmem>>, vector<128x256xf32>
      tpu.vector_store %arg11[%c0_37, %c0_38], %53 {strides = array<i32>} : memref<128x256xf32, #tpu.memory_space<vmem>>, vector<128x256xf32>,
      %cst_39 = arith.constant 0.000000e+00 : f32
      %55 = vector.broadcast %cst_39 : f32 to vector<1x256xf32>
      %c0_40 = arith.constant 0 : index
      %c0_41 = arith.constant 0 : index
      %56 = vector.load %arg12[%c0_40, %c0_41] : memref<1x256xf32, #tpu.memory_space<vmem>>, vector<1x256xf32>
      tpu.vector_store %arg12[%c0_40, %c0_41], %55 {strides = array<i32>} : memref<1x256xf32, #tpu.memory_space<vmem>>, vector<1x256xf32>,
    } else {
    }
    %c256_i32 = arith.constant 256 : i32
    %3 = arith.muli %arg1, %c256_i32 : i32
    %4 = tpu.assume_multiple %3, 256 : i32
    %c0 = arith.constant 0 : index
    %c0_1 = arith.constant 0 : index
    %5 = arith.index_cast %4 : i32 to index
    %6 = vector.load %arg2[%c0, %c0_1, %5] : memref<1x128x256xf32, #tpu.memory_space<vmem>>, vector<1x128x256xf32>
    %7 = vector.shape_cast %6 : vector<1x128x256xf32> to vector<128x256xf32>
    %8 = arith.truncf %7 : vector<128x256xf32> to vector<128x256xbf16>
    %c0_2 = arith.constant 0 : index
    %c0_3 = arith.constant 0 : index
    %9 = vector.load %arg3[%c0_2, %c0_3] : memref<32x128xbf16, #tpu.memory_space<vmem>>, vector<32x128xbf16>
    %cst = arith.constant dense<0.000000e+00> : vector<32x256xf32>
    %10 = tpu.matmul %9, %8, %cst {dimension_numbers = #tpu.dot_dimension_numbers<[1], [0], [0], [1], [0, 0, 1, 1], [], []>} : vector<32x128xbf16>, vector<128x256xbf16>, vector<32x256xf32> -> vector<32x256xf32>
    %c0_4 = arith.constant 0 : index
    %c0_5 = arith.constant 0 : index
    %11 = vector.load %arg5[%c0_4, %c0_5] : memref<128x128xbf16, #tpu.memory_space<vmem>>, vector<128x128xbf16>
    %cst_6 = arith.constant dense<0.000000e+00> : vector<128x256xf32>
    %12 = tpu.matmul %11, %8, %cst_6 {dimension_numbers = #tpu.dot_dimension_numbers<[1], [0], [0], [1], [0, 0, 1, 1], [], []>} : vector<128x128xbf16>, vector<128x256xbf16>, vector<128x256xf32> -> vector<128x256xf32>
    %c0_7 = arith.constant 0 : index
    %c0_8 = arith.constant 0 : index
    %13 = vector.load %arg6[%c0_7, %c0_8] : memref<128x1xf32, #tpu.memory_space<vmem>>, vector<128x1xf32>
    %14 = vector.broadcast %13 : vector<128x1xf32> to vector<128x256xf32>
    %15 = arith.addf %12, %14 : vector<128x256xf32>
    %16 = arith.truncf %10 : vector<32x256xf32> to vector<32x256xbf16>
    %c0_9 = arith.constant 0 : index
    %c0_10 = arith.constant 0 : index
    %17 = vector.load %arg10[%c0_9, %c0_10] : memref<32x256xbf16, #tpu.memory_space<vmem>>, vector<32x256xbf16>
    %cst_11 = arith.constant dense<0.000000e+00> : vector<256x256xf32>
    %18 = tpu.matmul %16, %17, %cst_11 {dimension_numbers = #tpu.dot_dimension_numbers<[0], [0], [1], [1], [0, 1, 1, 1], [], []>} : vector<32x256xbf16>, vector<32x256xbf16>, vector<256x256xf32> -> vector<256x256xf32>
    %cst_12 = arith.constant dense<0xFF800000> : vector<256xf32>
    %19 = vector.multi_reduction <maximumf>, %18, %cst_12 [1] : vector<256x256xf32> to vector<256xf32>
    %20 = vector.shape_cast %19 : vector<256xf32> to vector<256x1xf32>
    %21 = vector.broadcast %20 : vector<256x1xf32> to vector<256x256xf32>
    %22 = arith.subf %18, %21 : vector<256x256xf32>
    %23 = math.exp %22 : vector<256x256xf32>
    %cst_13 = arith.constant dense<0.000000e+00> : vector<256xf32>
    %24 = vector.multi_reduction <add>, %23, %cst_13 [1] : vector<256x256xf32> to vector<256xf32>
    %25 = vector.shape_cast %24 : vector<256xf32> to vector<256x1xf32>
    %26 = tpu.reciprocal %25 {approx = true} : vector<256x1xf32> -> vector<256x1xf32>
    %27 = vector.broadcast %26 : vector<256x1xf32> to vector<256x256xf32>
    %28 = arith.mulf %23, %27 : vector<256x256xf32>
    %c0_14 = arith.constant 0 : index
    %c0_15 = arith.constant 0 : index
    %29 = vector.load %arg11[%c0_14, %c0_15] : memref<128x256xf32, #tpu.memory_space<vmem>>, vector<128x256xf32>
    %30 = arith.truncf %15 : vector<128x256xf32> to vector<128x256xbf16>
    %31 = arith.truncf %28 : vector<256x256xf32> to vector<256x256xbf16>
    %cst_16 = arith.constant dense<0.000000e+00> : vector<128x256xf32>
    %32 = tpu.matmul %30, %31, %cst_16 {dimension_numbers = #tpu.dot_dimension_numbers<[1], [0], [0], [1], [0, 0, 1, 1], [], []>} : vector<128x256xbf16>, vector<256x256xbf16>, vector<128x256xf32> -> vector<128x256xf32>
    %33 = arith.addf %29, %32 : vector<128x256xf32>
    %c0_17 = arith.constant 0 : index
    %c0_18 = arith.constant 0 : index
    %34 = vector.load %arg11[%c0_17, %c0_18] : memref<128x256xf32, #tpu.memory_space<vmem>>, vector<128x256xf32>
    tpu.vector_store %arg11[%c0_17, %c0_18], %33 {strides = array<i32>} : memref<128x256xf32, #tpu.memory_space<vmem>>, vector<128x256xf32>,
    %c0_19 = arith.constant 0 : index
    %c0_20 = arith.constant 0 : index
    %35 = vector.load %arg12[%c0_19, %c0_20] : memref<1x256xf32, #tpu.memory_space<vmem>>, vector<1x256xf32>
    %cst_21 = arith.constant dense<0.000000e+00> : vector<256xf32>
    %36 = vector.multi_reduction <add>, %28, %cst_21 [0] : vector<256x256xf32> to vector<256xf32>
    %37 = vector.shape_cast %36 : vector<256xf32> to vector<1x256xf32>
    %38 = arith.addf %35, %37 : vector<1x256xf32>
    %c0_22 = arith.constant 0 : index
    %c0_23 = arith.constant 0 : index
    %39 = vector.load %arg12[%c0_22, %c0_23] : memref<1x256xf32, #tpu.memory_space<vmem>>, vector<1x256xf32>
    tpu.vector_store %arg12[%c0_22, %c0_23], %38 {strides = array<i32>} : memref<1x256xf32, #tpu.memory_space<vmem>>, vector<1x256xf32>,
    %c0_i32_24 = arith.constant 0 : i32
    %40 = arith.cmpi eq, %arg1, %c0_i32_24 : i32
    %41 = arith.extui %40 : i1 to i32
    %c0_i32_25 = arith.constant 0 : i32
    %42 = arith.cmpi ne, %41, %c0_i32_25 : i32
    scf.if %42 {
      %c0_26 = arith.constant 0 : index
      %c0_27 = arith.constant 0 : index
      %c0_28 = arith.constant 0 : index
      %43 = vector.load %arg2[%c0_26, %c0_27, %c0_28] : memref<1x128x256xf32, #tpu.memory_space<vmem>>, vector<1x128x256xf32>
      %44 = vector.shape_cast %43 : vector<1x128x256xf32> to vector<128x256xf32>
      %c0_29 = arith.constant 0 : index
      %c0_30 = arith.constant 0 : index
      %45 = vector.load %arg11[%c0_29, %c0_30] : memref<128x256xf32, #tpu.memory_space<vmem>>, vector<128x256xf32>
      %c0_31 = arith.constant 0 : index
      %c0_32 = arith.constant 0 : index
      %46 = vector.load %arg12[%c0_31, %c0_32] : memref<1x256xf32, #tpu.memory_space<vmem>>, vector<1x256xf32>
      %cst_33 = arith.constant 9.99999971E-10 : f32
      %47 = vector.broadcast %cst_33 : f32 to vector<1x256xf32>
      %48 = arith.addf %47, %46 : vector<1x256xf32>
      %cst_34 = arith.constant 1.000000e+00 : f32
      %49 = vector.broadcast %cst_34 : f32 to vector<1x256xf32>
      %50 = arith.divf %49, %48 : vector<1x256xf32>
      %51 = vector.broadcast %50 : vector<1x256xf32> to vector<128x256xf32>
      %52 = arith.mulf %45, %51 : vector<128x256xf32>
      %53 = arith.subf %44, %52 : vector<128x256xf32>
      %54 = arith.truncf %53 : vector<128x256xf32> to vector<128x256xbf16>
      %c0_35 = arith.constant 0 : index
      %c0_36 = arith.constant 0 : index
      %55 = vector.load %arg7[%c0_35, %c0_36] : memref<128x128xbf16, #tpu.memory_space<vmem>>, vector<128x128xbf16>
      %cst_37 = arith.constant dense<0.000000e+00> : vector<128x256xf32>
      %56 = tpu.matmul %55, %54, %cst_37 {dimension_numbers = #tpu.dot_dimension_numbers<[1], [0], [0], [1], [0, 0, 1, 1], [], []>} : vector<128x128xbf16>, vector<128x256xbf16>, vector<128x256xf32> -> vector<128x256xf32>
      %c0_38 = arith.constant 0 : index
      %c0_39 = arith.constant 0 : index
      %57 = vector.load %arg8[%c0_38, %c0_39] : memref<128x1xf32, #tpu.memory_space<vmem>>, vector<128x1xf32>
      %58 = vector.broadcast %57 : vector<128x1xf32> to vector<128x256xf32>
      %59 = arith.addf %56, %58 : vector<128x256xf32>
      %cst_40 = arith.constant 0.000000e+00 : f32
      %60 = vector.broadcast %cst_40 : f32 to vector<128x256xf32>
      %61 = arith.maximumf %59, %60 : vector<128x256xf32>
      %62 = arith.addf %44, %61 : vector<128x256xf32>
      %c0_41 = arith.constant 0 : index
      %c0_42 = arith.constant 0 : index
      %c0_43 = arith.constant 0 : index
      %63 = vector.load %arg9[%c0_41, %c0_42, %c0_43] : memref<1x128x256xf32, #tpu.memory_space<vmem>>, vector<1x128x256xf32>
      %64 = vector.shape_cast %63 : vector<1x128x256xf32> to vector<128x256xf32>
      %65 = vector.shape_cast %62 : vector<128x256xf32> to vector<1x128x256xf32>
      tpu.vector_store %arg9[%c0_41, %c0_42, %c0_43], %65 {strides = array<i32>} : memref<1x128x256xf32, #tpu.memory_space<vmem>>, vector<1x128x256xf32>,
    } else {
    }
    return
  }
  func.func @transform_0(%arg0: i32, %arg1: i32) -> (i32, i32, i32) {
    %c0_i32 = arith.constant 0 : i32
    %c0_i32_0 = arith.constant 0 : i32
    %c0_i32_1 = arith.constant 0 : i32
    return %arg0, %c0_i32, %c0_i32_0 : i32, i32, i32
  }
  func.func @transform_1(%arg0: i32, %arg1: i32) -> (i32, i32) {
    %c0_i32 = arith.constant 0 : i32
    %c0_i32_0 = arith.constant 0 : i32
    %c0_i32_1 = arith.constant 0 : i32
    return %c0_i32, %c0_i32_0 : i32, i32
  }
  func.func @transform_2(%arg0: i32, %arg1: i32) -> (i32, i32) {
    %c0_i32 = arith.constant 0 : i32
    %c0_i32_0 = arith.constant 0 : i32
    %c0_i32_1 = arith.constant 0 : i32
    return %c0_i32, %c0_i32_0 : i32, i32
  }
  func.func @transform_3(%arg0: i32, %arg1: i32) -> (i32, i32) {
    %c0_i32 = arith.constant 0 : i32
    %c0_i32_0 = arith.constant 0 : i32
    %c0_i32_1 = arith.constant 0 : i32
    return %c0_i32, %c0_i32_0 : i32, i32
  }
  func.func @transform_4(%arg0: i32, %arg1: i32) -> (i32, i32) {
    %c0_i32 = arith.constant 0 : i32
    %c0_i32_0 = arith.constant 0 : i32
    %c0_i32_1 = arith.constant 0 : i32
    return %c0_i32, %c0_i32_0 : i32, i32
  }
  func.func @transform_5(%arg0: i32, %arg1: i32) -> (i32, i32) {
    %c0_i32 = arith.constant 0 : i32
    %c0_i32_0 = arith.constant 0 : i32
    %c0_i32_1 = arith.constant 0 : i32
    return %c0_i32, %c0_i32_0 : i32, i32
  }
  func.func @transform_6(%arg0: i32, %arg1: i32) -> (i32, i32) {
    %c0_i32 = arith.constant 0 : i32
    %c0_i32_0 = arith.constant 0 : i32
    %c0_i32_1 = arith.constant 0 : i32
    return %c0_i32, %c0_i32_0 : i32, i32
  }
  func.func @transform_7(%arg0: i32, %arg1: i32) -> (i32, i32, i32) {
    %c0_i32 = arith.constant 0 : i32
    %c0_i32_0 = arith.constant 0 : i32
    %c0_i32_1 = arith.constant 0 : i32
    return %arg0, %c0_i32, %c0_i32_0 : i32, i32, i32
  }
}

</mosaic_0001>

<llo_original>
// kernel: oa_forward.1
$region0: #{oa_forward.1}
  #allocation0 [shape = 'u32[]', space=smem, size = 0x4, offset = 0x4, fixed_abs, tag = 'smem constant byte address 0x4 - core index']
  #allocation1 [shape = 'u32[144,128]{1,0:T(1,128)}', space=vmem, size = 0x12000, scoped, tag = 'internal scratch']
  #allocation2 [shape = 'bf16[32,256]{1,0:T(8,128)(2,1)}', space=vmem, size = 0x4000, scoped, tag = 'scratch operand']
  #allocation3 [shape = 'f32[128,256]{1,0:T(8,128)}', space=vmem, size = 0x20000, scoped, tag = 'scratch operand']
  #allocation4 [shape = 'f32[1,256]{1,0:T(1,128)}', space=vmem, size = 0x400, scoped, tag = 'scratch operand']
  %s0 = inlined_call_operand.vmem [shape: f32[2,128,256], index: 0, kind: input, shape index: {}]
  %s1 = inlined_call_operand.vmem [shape: bf16[32,128], index: 1, kind: input, shape index: {}]
  %s2 = inlined_call_operand.vmem [shape: f32[32,1], index: 2, kind: input, shape index: {}]
  %s3 = inlined_call_operand.vmem [shape: bf16[128,128], index: 3, kind: input, shape index: {}]
  %s4 = inlined_call_operand.vmem [shape: f32[128,1], index: 4, kind: input, shape index: {}]
  %s5 = inlined_call_operand.vmem [shape: bf16[128,128], index: 5, kind: input, shape index: {}]
  %s6 = inlined_call_operand.vmem [shape: f32[128,1], index: 6, kind: input, shape index: {}]
  %s7 = inlined_call_operand.hbm [shape: f32[2,128,256], index: 7, kind: output, shape index: {}]
  %s8 = sld [smem:[#allocation0]]
  $region69: #{oa_forward.1} parent=0
    _
  %s10 = ssub.s32 1, %s8
  %s11 = scalar_select 0, %s10, %s8
  $region1: #{oa_forward.1} parent=0
    #allocation5 [shape = 'u8[262144]{0}', space=vmem, size = 0x40000, scoped, tag = 'output window, operand 0']
    #allocation6 [shape = 's32[2]{0}', space=sflag, size = 0x8, scoped, tag = 'scoped memory for oa_forward.1']
    %12 = vsyncpa [#allocation6], 0
    %s13 = scalar_lea.sflag [#allocation6], 1
    %14 = vsyncpa %s13, 0
    loop: start=0, step=1, limit=4
    $region2: #{oa_forward.1} parent=1 // loop_pre_header
      _
    $region3: #{oa_forward.1} parent=1 // loop_header
      %s16 = sphi 0, %s20
      %p17 = scmp.ge.s32.totalorder %s16, 4
      %s23 = sphi 0, %s35
      %s24 = sphi 0, %s31
      %s25 = sphi 0, %s23
      %s26 = sphi 0, %s24
      %s27 = sphi 0, %s25
      %s28 = sphi 0, %s26
      %s38 = sphi 0, %s40
      %s41 = sphi 0, %s38
      %s42 = sphi 0, %s41
      %s58 = sphi 0, %s42
      %s62 = sphi 0, %s62
      %s64 = sphi 0, %s62
      %s65 = sphi 0, %s64
      %s79 = sphi 0, %s65
      %s83 = sphi 0, %s83
      %s85 = sphi 0, %s83
      %s86 = sphi 0, %s85
      %s100 = sphi 0, %s86
      %s104 = sphi 0, %s104
      %s106 = sphi 0, %s104
      %s107 = sphi 0, %s106
      %s121 = sphi 0, %s107
      %s125 = sphi 0, %s125
      %s127 = sphi 0, %s125
      %s128 = sphi 0, %s127
      %s142 = sphi 0, %s128
      %s146 = sphi 0, %s146
      %s148 = sphi 0, %s146
      %s149 = sphi 0, %s148
      %s163 = sphi 0, %s149
      %s167 = sphi 0, %s167
      %s169 = sphi 0, %s167
      %s170 = sphi 0, %s169
      %s184 = sphi 0, %s170
      %s190 = sphi 0, %s192
      %s193 = sphi 0, %s190
      %s194 = sphi 0, %s193
      %s210 = sphi 0, %s194
    $region4: #{oa_forward.1} parent=1 // loop_header_branch
      %19 = sbr.rel (%p17) target = $region8
    $region5: #{oa_forward.1} parent=1 // loop_body
      %s21 = ssub.s32 %s16, 1
      %s22 = ssub.s32 %s16, 2
      %s29 = sadd.s32 1, %s24
      %p30 = scmp.ge.s32.totalorder %s29, 1
      %s31 = scalar_select %p30, 0, %s29
      %s32 = sadd.s32 1, %s23
      %s33 = scalar_select %p30, %s32, %s23
      %p34 = scmp.ge.s32.totalorder %s33, 2
      %s35 = scalar_select %p34, 0, %s33
      %s36 = ssub.s32 %s23, %s35
      %p37 = scmp.eq.s32.totalorder %s36, 0
      %s39 = sadd.s32 %s38, 1
      %s40 = scalar_select %p37, %s38, %s39
      %p43 = pneg %p37
      %p44 = scmp.eq.s32.totalorder %s16, 1
      %p45 = por %p43, %p44
      %p46 = scmp.ne.s32.totalorder %s38, %s41
      %p47 = scmp.eq.s32.totalorder %s16, 0
      %p48 = por %p46, %p47
      %p49 = scmp.ne.s32.totalorder %s38, %s41
      %p50 = scmp.eq.s32.totalorder %s21, 1
      %p51 = por %p49, %p50
      %p52 = scmp.ne.s32.totalorder %s41, %s42
      %p53 = scmp.eq.s32.totalorder %s21, 0
      %p54 = por %p52, %p53
      %p55 = scmp.ne.s32.totalorder %s41, %s42
      %p56 = scmp.eq.s32.totalorder %s22, 1
      %p57 = por %p55, %p56
      %p59 = scmp.ne.s32.totalorder %s42, %s58
      %p60 = scmp.eq.s32.totalorder %s22, 0
      %p61 = por %p59, %p60
      %s63 = sadd.s32 %s62, 1
      %p66 = scmp.eq.s32.totalorder %s16, 1
      %p67 = scmp.ne.s32.totalorder %s62, %s64
      %p68 = scmp.eq.s32.totalorder %s16, 0
      %p69 = por %p67, %p68
      %p70 = scmp.ne.s32.totalorder %s62, %s64
      %p71 = scmp.eq.s32.totalorder %s21, 1
      %p72 = por %p70, %p71
      %p73 = scmp.ne.s32.totalorder %s64, %s65
      %p74 = scmp.eq.s32.totalorder %s21, 0
      %p75 = por %p73, %p74
      %p76 = scmp.ne.s32.totalorder %s64, %s65
      %p77 = scmp.eq.s32.totalorder %s22, 1
      %p78 = por %p76, %p77
      %p80 = scmp.ne.s32.totalorder %s65, %s79
      %p81 = scmp.eq.s32.totalorder %s22, 0
      %p82 = por %p80, %p81
      %s84 = sadd.s32 %s83, 1
      %p87 = scmp.eq.s32.totalorder %s16, 1
      %p88 = scmp.ne.s32.totalorder %s83, %s85
      %p89 = scmp.eq.s32.totalorder %s16, 0
      %p90 = por %p88, %p89
      %p91 = scmp.ne.s32.totalorder %s83, %s85
      %p92 = scmp.eq.s32.totalorder %s21, 1
      %p93 = por %p91, %p92
      %p94 = scmp.ne.s32.totalorder %s85, %s86
      %p95 = scmp.eq.s32.totalorder %s21, 0
      %p96 = por %p94, %p95
      %p97 = scmp.ne.s32.totalorder %s85, %s86
      %p98 = scmp.eq.s32.totalorder %s22, 1
      %p99 = por %p97, %p98
      %p101 = scmp.ne.s32.totalorder %s86, %s100
      %p102 = scmp.eq.s32.totalorder %s22, 0
      %p103 = por %p101, %p102
      %s105 = sadd.s32 %s104, 1
      %p108 = scmp.eq.s32.totalorder %s16, 1
      %p109 = scmp.ne.s32.totalorder %s104, %s106
      %p110 = scmp.eq.s32.totalorder %s16, 0
      %p111 = por %p109, %p110
      %p112 = scmp.ne.s32.totalorder %s104, %s106
      %p113 = scmp.eq.s32.totalorder %s21, 1
      %p114 = por %p112, %p113
      %p115 = scmp.ne.s32.totalorder %s106, %s107
      %p116 = scmp.eq.s32.totalorder %s21, 0
      %p117 = por %p115, %p116
      %p118 = scmp.ne.s32.totalorder %s106, %s107
      %p119 = scmp.eq.s32.totalorder %s22, 1
      %p120 = por %p118, %p119
      %p122 = scmp.ne.s32.totalorder %s107, %s121
      %p123 = scmp.eq.s32.totalorder %s22, 0
      %p124 = por %p122, %p123
      %s126 = sadd.s32 %s125, 1
      %p129 = scmp.eq.s32.totalorder %s16, 1
      %p130 = scmp.ne.s32.totalorder %s125, %s127
      %p131 = scmp.eq.s32.totalorder %s16, 0
      %p132 = por %p130, %p131
      %p133 = scmp.ne.s32.totalorder %s125, %s127
      %p134 = scmp.eq.s32.totalorder %s21, 1
      %p135 = por %p133, %p134
      %p136 = scmp.ne.s32.totalorder %s127, %s128
      %p137 = scmp.eq.s32.totalorder %s21, 0
      %p138 = por %p136, %p137
      %p139 = scmp.ne.s32.totalorder %s127, %s128
      %p140 = scmp.eq.s32.totalorder %s22, 1
      %p141 = por %p139, %p140
      %p143 = scmp.ne.s32.totalorder %s128, %s142
      %p144 = scmp.eq.s32.totalorder %s22, 0
      %p145 = por %p143, %p144
      %s147 = sadd.s32 %s146, 1
      %p150 = scmp.eq.s32.totalorder %s16, 1
      %p151 = scmp.ne.s32.totalorder %s146, %s148
      %p152 = scmp.eq.s32.totalorder %s16, 0
      %p153 = por %p151, %p152
      %p154 = scmp.ne.s32.totalorder %s146, %s148
      %p155 = scmp.eq.s32.totalorder %s21, 1
      %p156 = por %p154, %p155
      %p157 = scmp.ne.s32.totalorder %s148, %s149
      %p158 = scmp.eq.s32.totalorder %s21, 0
      %p159 = por %p157, %p158
      %p160 = scmp.ne.s32.totalorder %s148, %s149
      %p161 = scmp.eq.s32.totalorder %s22, 1
      %p162 = por %p160, %p161
      %p164 = scmp.ne.s32.totalorder %s149, %s163
      %p165 = scmp.eq.s32.totalorder %s22, 0
      %p166 = por %p164, %p165
      %s168 = sadd.s32 %s167, 1
      %p171 = scmp.eq.s32.totalorder %s16, 1
      %p172 = scmp.ne.s32.totalorder %s167, %s169
      %p173 = scmp.eq.s32.totalorder %s16, 0
      %p174 = por %p172, %p173
      %p175 = scmp.ne.s32.totalorder %s167, %s169
      %p176 = scmp.eq.s32.totalorder %s21, 1
      %p177 = por %p175, %p176
      %p178 = scmp.ne.s32.totalorder %s169, %s170
      %p179 = scmp.eq.s32.totalorder %s21, 0
      %p180 = por %p178, %p179
      %p181 = scmp.ne.s32.totalorder %s169, %s170
      %p182 = scmp.eq.s32.totalorder %s22, 1
      %p183 = por %p181, %p182
      %p185 = scmp.ne.s32.totalorder %s170, %s184
      %p186 = scmp.eq.s32.totalorder %s22, 0
      %p187 = por %p185, %p186
      %s188 = ssub.s32 %s23, %s35
      %p189 = scmp.eq.s32.totalorder %s188, 0
      %s191 = sadd.s32 %s190, 1
      %s192 = scalar_select %p189, %s190, %s191
      %p195 = pneg %p189
      %p196 = scmp.eq.s32.totalorder %s16, 1
      %p197 = por %p195, %p196
      %p198 = scmp.ne.s32.totalorder %s190, %s193
      %p199 = scmp.eq.s32.totalorder %s16, 0
      %p200 = por %p198, %p199
      %p201 = scmp.ne.s32.totalorder %s190, %s193
      %p202 = scmp.eq.s32.totalorder %s21, 1
      %p203 = por %p201, %p202
      %p204 = scmp.ne.s32.totalorder %s193, %s194
      %p205 = scmp.eq.s32.totalorder %s21, 0
      %p206 = por %p204, %p205
      %p207 = scmp.ne.s32.totalorder %s193, %s194
      %p208 = scmp.eq.s32.totalorder %s22, 1
      %p209 = por %p207, %p208
      %p211 = scmp.ne.s32.totalorder %s194, %s210
      %p212 = scmp.eq.s32.totalorder %s22, 0
      %p213 = por %p211, %p212
      %p214 = scmp.le.s32.totalorder 1, %s16
      %p215 = scmp.lt.s32.totalorder %s16, 3
      %p216 = pnand %p214, %p215
      %p217 = pneg %p216
      // Predicated region
      $region9: #{oa_forward.1} parent=5 // pred_check
        _
      $region10: #{oa_forward.1} parent=5 // pred_check_branch
        %219 = sbr.rel (%p216) target = $region12
      $region11: #{oa_forward.1} parent=5 // pred_region
        %s220 = ssub.s32 %s16, 1
        // Predicated region
        $region13: #{oa_forward.1} parent=11 // pred_check
          %p221 = pneg %p75
        $region14: #{oa_forward.1} parent=11 // pred_check_branch
          %223 = sbr.rel (%p221) target = $region16
        $region15: #{oa_forward.1} parent=11 // pred_region
          _
        $region16: #{oa_forward.1} parent=11 // pred_fallthru
          _
        // Predicated region
        $region17: #{oa_forward.1} parent=11 // pred_check
          %p224 = pneg %p96
        $region18: #{oa_forward.1} parent=11 // pred_check_branch
          %226 = sbr.rel (%p224) target = $region20
        $region19: #{oa_forward.1} parent=11 // pred_region
          _
        $region20: #{oa_forward.1} parent=11 // pred_fallthru
          _
        // Predicated region
        $region21: #{oa_forward.1} parent=11 // pred_check
          %p227 = pneg %p117
        $region22: #{oa_forward.1} parent=11 // pred_check_branch
          %229 = sbr.rel (%p227) target = $region24
        $region23: #{oa_forward.1} parent=11 // pred_region
          _
        $region24: #{oa_forward.1} parent=11 // pred_fallthru
          _
        // Predicated region
        $region25: #{oa_forward.1} parent=11 // pred_check
          %p230 = pneg %p138
        $region26: #{oa_forward.1} parent=11 // pred_check_branch
          %232 = sbr.rel (%p230) target = $region28
        $region27: #{oa_forward.1} parent=11 // pred_region
          _
        $region28: #{oa_forward.1} parent=11 // pred_fallthru
          _
        // Predicated region
        $region29: #{oa_forward.1} parent=11 // pred_check
          %p233 = pneg %p159
        $region30: #{oa_forward.1} parent=11 // pred_check_branch
          %235 = sbr.rel (%p233) target = $region32
        $region31: #{oa_forward.1} parent=11 // pred_region
          _
        $region32: #{oa_forward.1} parent=11 // pred_fallthru
          _
        // Predicated region
        $region33: #{oa_forward.1} parent=11 // pred_check
          %p236 = pneg %p180
        $region34: #{oa_forward.1} parent=11 // pred_check_branch
          %238 = sbr.rel (%p236) target = $region36
        $region35: #{oa_forward.1} parent=11 // pred_region
          _
        $region36: #{oa_forward.1} parent=11 // pred_fallthru
          _
      $region12: #{oa_forward.1} parent=5 // pred_fallthru
        _
      %p239 = scmp.lt.s32.totalorder %s16, 2
      // Predicated region
      $region37: #{oa_forward.1} parent=5 // pred_check
        %p240 = pneg %p239
      $region38: #{oa_forward.1} parent=5 // pred_check_branch
        %242 = sbr.rel (%p240) target = $region40
      $region39: #{oa_forward.1} parent=5 // pred_region
        // Predicated region
        $region41: #{oa_forward.1} parent=39 // pred_check
          %p243 = pneg %p48
        $region42: #{oa_forward.1} parent=39 // pred_check_branch
          %245 = sbr.rel (%p243) target = $region44
        $region43: #{oa_forward.1} parent=39 // pred_region
          %p246 = scmp.lt.s32.totalorder %s23, 1
          %s247 = scalar_select %p246, %s23, 1
          %s248 = smul.addr %s247, 32
          %s249 = smul.addr %s248, 8
          %s250 = scalar_lea.vmem %s0, %s249
        $region44: #{oa_forward.1} parent=39 // pred_fallthru
          _
      $region40: #{oa_forward.1} parent=5 // pred_fallthru
        _
      %p251 = scmp.le.s32.totalorder 1, %s16
      %p252 = scmp.lt.s32.totalorder %s16, 3
      %p253 = pnand %p251, %p252
      %p254 = pneg %p253
      // Predicated region
      $region45: #{oa_forward.1} parent=5 // pred_check
        _
      $region46: #{oa_forward.1} parent=5 // pred_check_branch
        %256 = sbr.rel (%p253) target = $region48
      $region47: #{oa_forward.1} parent=5 // pred_region
        %s257 = ssub.s32 %s16, 1
        %p258 = scmp.lt.s32.totalorder %s25, 1
        %s259 = scalar_select %p258, %s25, 1
        %s260 = smul.addr %s259, 32
        %s261 = smul.addr %s260, 8
        %s262 = scalar_lea.vmem %s0, %s261
        %p263 = pneg %p54
        %p264 = pneg %p51
        %p265 = pneg %p75
        %p266 = pneg %p72
        %p267 = pneg %p96
        %p268 = pneg %p93
        %p269 = pneg %p117
        %p270 = pneg %p114
        %p271 = pneg %p138
        %p272 = pneg %p135
        %p273 = pneg %p159
        %p274 = pneg %p156
        %p275 = pneg %p180
        %p276 = pneg %p177
        %p277 = pneg %p206
        %p278 = pneg %p203
        %s279 = sand.u32 %s193, 1
        %s280 = scalar_lea.sflag [#allocation6], %s279
        %s281 = sand.u32 %s193, 1
        %s282 = smul.addr %s281, 256
        %s283 = scalar_lea.vmem [#allocation5], %s282
        %p284 = scmp.lt.s32.totalorder %s25, 1
        %s285 = scalar_select %p284, %s25, 1
        %s286 = smul.addr %s285, 32
        %s287 = smul.addr %s286, 8
        %s288 = scalar_lea.vmem %s0, %s287
        %p290 = scmp.eq.s32.totalorder %s26, 0
        // Predicated region
        $region49: #{oa_forward.1} parent=47 // pred_check
          %p291 = pneg %p290
        $region50: #{oa_forward.1} parent=47 // pred_check_branch
          %293 = sbr.rel (%p291) target = $region52
        $region51: #{oa_forward.1} parent=47 // pred_region
          %v294 = vld [vmem:[%s288] sm:$0xff]
          %v295 = vld [vmem:[%s288 + $0x8] sm:$0xff]
          %v296 = vld [vmem:[%s288 + $0x10] sm:$0xff]
          %v297 = vld [vmem:[%s288 + $0x18] sm:$0xff]
          %v298 = vld [vmem:[%s288 + $0x20] sm:$0xff]
          %v299 = vld [vmem:[%s288 + $0x28] sm:$0xff]
          %v300 = vld [vmem:[%s288 + $0x30] sm:$0xff]
          %v301 = vld [vmem:[%s288 + $0x38] sm:$0xff]
          %v302 = vld [vmem:[%s288 + $0x40] sm:$0xff]
          %v303 = vld [vmem:[%s288 + $0x48] sm:$0xff]
          %v304 = vld [vmem:[%s288 + $0x50] sm:$0xff]
          %v305 = vld [vmem:[%s288 + $0x58] sm:$0xff]
          %v306 = vld [vmem:[%s288 + $0x60] sm:$0xff]
          %v307 = vld [vmem:[%s288 + $0x68] sm:$0xff]
          %v308 = vld [vmem:[%s288 + $0x70] sm:$0xff]
          %v309 = vld [vmem:[%s288 + $0x78] sm:$0xff]
          %v310 = vld [vmem:[%s288 + $0x80] sm:$0xff]
          %v311 = vld [vmem:[%s288 + $0x88] sm:$0xff]
          %v312 = vld [vmem:[%s288 + $0x90] sm:$0xff]
          %v313 = vld [vmem:[%s288 + $0x98] sm:$0xff]
          %v314 = vld [vmem:[%s288 + $0xa0] sm:$0xff]
          %v315 = vld [vmem:[%s288 + $0xa8] sm:$0xff]
          %v316 = vld [vmem:[%s288 + $0xb0] sm:$0xff]
          %v317 = vld [vmem:[%s288 + $0xb8] sm:$0xff]
          %v318 = vld [vmem:[%s288 + $0xc0] sm:$0xff]
          %v319 = vld [vmem:[%s288 + $0xc8] sm:$0xff]
          %v320 = vld [vmem:[%s288 + $0xd0] sm:$0xff]
          %v321 = vld [vmem:[%s288 + $0xd8] sm:$0xff]
          %v322 = vld [vmem:[%s288 + $0xe0] sm:$0xff]
          %v323 = vld [vmem:[%s288 + $0xe8] sm:$0xff]
          %v324 = vld [vmem:[%s288 + $0xf0] sm:$0xff]
          %v325 = vld [vmem:[%s288 + $0xf8] sm:$0xff]
          %v326 = vpack.c.bf16 %v296, %v294
          %v327 = vpack.c.bf16 %v297, %v295
          %v328 = vpack.c.bf16 %v300, %v298
          %v329 = vpack.c.bf16 %v301, %v299
          %v330 = vpack.c.bf16 %v304, %v302
          %v331 = vpack.c.bf16 %v305, %v303
          %v332 = vpack.c.bf16 %v308, %v306
          %v333 = vpack.c.bf16 %v309, %v307
          %v334 = vpack.c.bf16 %v312, %v310
          %v335 = vpack.c.bf16 %v313, %v311
          %v336 = vpack.c.bf16 %v316, %v314
          %v337 = vpack.c.bf16 %v317, %v315
          %v338 = vpack.c.bf16 %v320, %v318
          %v339 = vpack.c.bf16 %v321, %v319
          %v340 = vpack.c.bf16 %v324, %v322
          %v341 = vpack.c.bf16 %v325, %v323
          %v342 = vld [vmem:[%s1] sm:$0xf]
          %v343 = vld [vmem:[%s1 + $0x4] sm:$0xf]
          %v344 = vld [vmem:[%s1 + $0x8] sm:$0xf]
          %v345 = vld [vmem:[%s1 + $0xc] sm:$0xf]
          %v346 = vld [vmem:[%s2] sm:$0xff]
          %v347 = vld [vmem:[%s2 + $0x8] sm:$0xff]
          %v348 = vld [vmem:[%s2 + $0x10] sm:$0xff]
          %v349 = vld [vmem:[%s2 + $0x18] sm:$0xff]
          %351 = vset.pattern.permute.xlu0 0
          %352 = vperm.xlu0 %351, %v346
          %v353 = vpop.permute.xlu0 %352
          %356 = vset.pattern.permute.xlu0 0
          %357 = vperm.xlu0 %356, %v347
          %v358 = vpop.permute.xlu0 %357
          %361 = vset.pattern.permute.xlu0 0
          %362 = vperm.xlu0 %361, %v348
          %v363 = vpop.permute.xlu0 %362
          %366 = vset.pattern.permute.xlu0 0
          %367 = vperm.xlu0 %366, %v349
          %v368 = vpop.permute.xlu0 %367
          %v374 = vunpack.c.l.b16 %v342
          %v375 = vunpack.c.l.b16 %v343
          %v376 = vunpack.c.l.b16 %v344
          %v377 = vunpack.c.l.b16 %v345
          %v378 = vpack.c.b16 %v375, %v374
          %v379 = vpack.c.b16 %v377, %v376
          %382 = vmatprep.subr.bf16.mxu0 %v341
          %383 = vmatpush1.bf16.msra.mxu0 %v340
          %384 = vmatprep.subr.bf16.mxu0 %v339
          %385 = vmatpush1.bf16.msra.mxu0 %v338
          %386 = vmatprep.subr.bf16.mxu0 %v337
          %387 = vmatpush1.bf16.msra.mxu0 %v336
          %388 = vmatprep.subr.bf16.mxu0 %v335
          %389 = vmatpush1.bf16.msra.mxu0 %v334
          %390 = vmatprep.subr.bf16.mxu0 %v333
          %391 = vmatpush1.bf16.msra.mxu0 %v332
          %392 = vmatprep.subr.bf16.mxu0 %v331
          %393 = vmatpush1.bf16.msra.mxu0 %v330
          %394 = vmatprep.subr.bf16.mxu0 %v329
          %395 = vmatpush1.bf16.msra.mxu0 %v328
          %396 = vmatprep.subr.bf16.mxu0 %v327
          %397 = vmatpush1.bf16.msra.mxu0 %v326
          %398 = vmatprep.subr.bf16.mxu0 0
          %399 = vmatpush2.bf16.msra.mxu0 0
          %400 = vmatprep.subr.bf16.mxu0 0
          %401 = vmatpush2.bf16.msra.mxu0 0
          %402 = vmatprep.subr.bf16.mxu0 0
          %403 = vmatpush2.bf16.msra.mxu0 0
          %404 = vmatprep.subr.bf16.mxu0 0
          %405 = vmatpush2.bf16.msra.mxu0 0
          %406 = vmatprep.subr.bf16.mxu0 0
          %407 = vmatpush2.bf16.msra.mxu0 0
          %408 = vmatprep.subr.bf16.mxu0 0
          %409 = vmatpush2.bf16.msra.mxu0 0
          %410 = vmatprep.subr.bf16.mxu0 0
          %411 = vmatpush2.bf16.msra.mxu0 0
          %412 = vmatprep.subr.bf16.mxu0 0
          %413 = vmatpush2.bf16.msra.mxu0 0
          %414 = vmatprep.mubr.bf16.mxu0 0
          %415 = vmatmul.mubr.bf16.gmra.mxu0 %v378
          %v416 = vpop.f32.mrf.mxu0
          %v417 = vadd.f32 %v353, %v416
          %v418 = vpop.f32.mrf.mxu0
          %v419 = vadd.f32 %v353, %v418
          %v420 = vpop.f32.mrf.mxu0
          %v421 = vadd.f32 %v358, %v420
          %v422 = vpop.f32.mrf.mxu0
          %v423 = vadd.f32 %v358, %v422
          %424 = vmatprep.mubr.bf16.mxu0 0
          %425 = vmatmul.mubr.bf16.gmra.mxu0 %v379
          %v426 = vpop.f32.mrf.mxu0
          %v427 = vadd.f32 %v363, %v426
          %v428 = vpop.f32.mrf.mxu0
          %v429 = vadd.f32 %v363, %v428
          %v430 = vpop.f32.mrf.mxu0
          %v431 = vadd.f32 %v368, %v430
          %v432 = vpop.f32.mrf.mxu0
          %v433 = vadd.f32 %v368, %v432
          %434 = vdwg.mxu0
          %v435 = vpack.c.bf16 %v421, %v417
          %v436 = vpack.c.bf16 %v423, %v419
          %v437 = vpack.c.bf16 %v431, %v427
          %v438 = vpack.c.bf16 %v433, %v429
          %v443 = vunpack.c.l.b16 %v435
          %v444 = vunpack.c.l.b16 %v436
          %v445 = vunpack.c.h.b16 %v435
          %v446 = vunpack.c.h.b16 %v436
          %v447 = vunpack.c.l.b16 %v437
          %v448 = vunpack.c.l.b16 %v438
          %v449 = vunpack.c.h.b16 %v437
          %v450 = vunpack.c.h.b16 %v438
          %v451 = vpack.c.b16 %v444, %v443
          %v452 = vpack.c.b16 %v446, %v445
          %v453 = vpack.c.b16 %v448, %v447
          %v454 = vpack.c.b16 %v450, %v449
          %459 = vst [vmem:[#allocation2] sm:$0xff] %v451
          %460 = vst [vmem:[#allocation2 + $0x8] sm:$0xff] %v452
          %461 = vst [vmem:[#allocation2 + $0x10] sm:$0xff] %v453
          %462 = vst [vmem:[#allocation2 + $0x18] sm:$0xff] %v454
          %463 = vst [vmem:[#allocation3] sm:$0xff] 0.0
          %464 = vst [vmem:[#allocation3 + $0x8] sm:$0xff] 0.0
          %465 = vst [vmem:[#allocation3 + $0x10] sm:$0xff] 0.0
          %466 = vst [vmem:[#allocation3 + $0x18] sm:$0xff] 0.0
          %467 = vst [vmem:[#allocation3 + $0x20] sm:$0xff] 0.0
          %468 = vst [vmem:[#allocation3 + $0x28] sm:$0xff] 0.0
          %469 = vst [vmem:[#allocation3 + $0x30] sm:$0xff] 0.0
          %470 = vst [vmem:[#allocation3 + $0x38] sm:$0xff] 0.0
          %471 = vst [vmem:[#allocation3 + $0x40] sm:$0xff] 0.0
          %472 = vst [vmem:[#allocation3 + $0x48] sm:$0xff] 0.0
          %473 = vst [vmem:[#allocation3 + $0x50] sm:$0xff] 0.0
          %474 = vst [vmem:[#allocation3 + $0x58] sm:$0xff] 0.0
          %475 = vst [vmem:[#allocation3 + $0x60] sm:$0xff] 0.0
          %476 = vst [vmem:[#allocation3 + $0x68] sm:$0xff] 0.0
          %477 = vst [vmem:[#allocation3 + $0x70] sm:$0xff] 0.0
          %478 = vst [vmem:[#allocation3 + $0x78] sm:$0xff] 0.0
          %479 = vst [vmem:[#allocation3 + $0x80] sm:$0xff] 0.0
          %480 = vst [vmem:[#allocation3 + $0x88] sm:$0xff] 0.0
          %481 = vst [vmem:[#allocation3 + $0x90] sm:$0xff] 0.0
          %482 = vst [vmem:[#allocation3 + $0x98] sm:$0xff] 0.0
          %483 = vst [vmem:[#allocation3 + $0xa0] sm:$0xff] 0.0
          %484 = vst [vmem:[#allocation3 + $0xa8] sm:$0xff] 0.0
          %485 = vst [vmem:[#allocation3 + $0xb0] sm:$0xff] 0.0
          %486 = vst [vmem:[#allocation3 + $0xb8] sm:$0xff] 0.0
          %487 = vst [vmem:[#allocation3 + $0xc0] sm:$0xff] 0.0
          %488 = vst [vmem:[#allocation3 + $0xc8] sm:$0xff] 0.0
          %489 = vst [vmem:[#allocation3 + $0xd0] sm:$0xff] 0.0
          %490 = vst [vmem:[#allocation3 + $0xd8] sm:$0xff] 0.0
          %491 = vst [vmem:[#allocation3 + $0xe0] sm:$0xff] 0.0
          %492 = vst [vmem:[#allocation3 + $0xe8] sm:$0xff] 0.0
          %493 = vst [vmem:[#allocation3 + $0xf0] sm:$0xff] 0.0
          %494 = vst [vmem:[#allocation3 + $0xf8] sm:$0xff] 0.0
          %v495 = vlaneseq
          %vm496 = vcmp.ge.s32.totalorder %v495, 0
          %vm497 = vcmp.lt.s32.totalorder %v495, 256
          %vm498 = vmand %vm496, %vm497
          %499 = vst.msk [vmem:[#allocation4] sm:$0x3] %vm498, 0.0
        $region52: #{oa_forward.1} parent=47 // pred_fallthru
          _
        %s500 = smul.u32 %s26, 256
        %s501 = sshra.s32 %s500, 7
        %s502 = sand.u32 %s500, 127
        %s503 = smul.addr %s501, 8
        %s504 = scalar_lea.vmem %s288, %s503
        %v505 = vld [vmem:[%s504] sm:$0xff]
        %v506 = vld [vmem:[%s504 + $0x8] sm:$0xff]
        %v507 = vld [vmem:[%s504 + $0x10] sm:$0xff]
        %v508 = vld [vmem:[%s504 + $0x18] sm:$0xff]
        %v509 = vld [vmem:[%s504 + $0x20] sm:$0xff]
        %v510 = vld [vmem:[%s504 + $0x28] sm:$0xff]
        %v511 = vld [vmem:[%s504 + $0x30] sm:$0xff]
        %v512 = vld [vmem:[%s504 + $0x38] sm:$0xff]
        %v513 = vld [vmem:[%s504 + $0x40] sm:$0xff]
        %v514 = vld [vmem:[%s504 + $0x48] sm:$0xff]
        %v515 = vld [vmem:[%s504 + $0x50] sm:$0xff]
        %v516 = vld [vmem:[%s504 + $0x58] sm:$0xff]
        %v517 = vld [vmem:[%s504 + $0x60] sm:$0xff]
        %v518 = vld [vmem:[%s504 + $0x68] sm:$0xff]
        %v519 = vld [vmem:[%s504 + $0x70] sm:$0xff]
        %v520 = vld [vmem:[%s504 + $0x78] sm:$0xff]
        %v521 = vld [vmem:[%s504 + $0x80] sm:$0xff]
        %v522 = vld [vmem:[%s504 + $0x88] sm:$0xff]
        %v523 = vld [vmem:[%s504 + $0x90] sm:$0xff]
        %v524 = vld [vmem:[%s504 + $0x98] sm:$0xff]
        %v525 = vld [vmem:[%s504 + $0xa0] sm:$0xff]
        %v526 = vld [vmem:[%s504 + $0xa8] sm:$0xff]
        %v527 = vld [vmem:[%s504 + $0xb0] sm:$0xff]
        %v528 = vld [vmem:[%s504 + $0xb8] sm:$0xff]
        %v529 = vld [vmem:[%s504 + $0xc0] sm:$0xff]
        %v530 = vld [vmem:[%s504 + $0xc8] sm:$0xff]
        %v531 = vld [vmem:[%s504 + $0xd0] sm:$0xff]
        %v532 = vld [vmem:[%s504 + $0xd8] sm:$0xff]
        %v533 = vld [vmem:[%s504 + $0xe0] sm:$0xff]
        %v534 = vld [vmem:[%s504 + $0xe8] sm:$0xff]
        %v535 = vld [vmem:[%s504 + $0xf0] sm:$0xff]
        %v536 = vld [vmem:[%s504 + $0xf8] sm:$0xff]
        %v537 = vpack.c.bf16 %v507, %v505
        %v538 = vpack.c.bf16 %v508, %v506
        %v539 = vpack.c.bf16 %v511, %v509
        %v540 = vpack.c.bf16 %v512, %v510
        %v541 = vpack.c.bf16 %v515, %v513
        %v542 = vpack.c.bf16 %v516, %v514
        %v543 = vpack.c.bf16 %v519, %v517
        %v544 = vpack.c.bf16 %v520, %v518
        %v545 = vpack.c.bf16 %v523, %v521
        %v546 = vpack.c.bf16 %v524, %v522
        %v547 = vpack.c.bf16 %v527, %v525
        %v548 = vpack.c.bf16 %v528, %v526
        %v549 = vpack.c.bf16 %v531, %v529
        %v550 = vpack.c.bf16 %v532, %v530
        %v551 = vpack.c.bf16 %v535, %v533
        %v552 = vpack.c.bf16 %v536, %v534
        %v553 = vld [vmem:[%s1] sm:$0xf]
        %v554 = vld [vmem:[%s1 + $0x4] sm:$0xf]
        %v555 = vld [vmem:[%s1 + $0x8] sm:$0xf]
        %v556 = vld [vmem:[%s1 + $0xc] sm:$0xf]
        %v561 = vunpack.c.l.b16 %v553
        %v562 = vunpack.c.l.b16 %v554
        %v563 = vunpack.c.l.b16 %v555
        %v564 = vunpack.c.l.b16 %v556
        %v565 = vpack.c.b16 %v562, %v561
        %v566 = vpack.c.b16 %v564, %v563
        %569 = vmatprep.subr.bf16.mxu0 %v552
        %570 = vmatpush1.bf16.msra.mxu0 %v551
        %571 = vmatprep.subr.bf16.mxu0 %v550
        %572 = vmatpush1.bf16.msra.mxu0 %v549
        %573 = vmatprep.subr.bf16.mxu0 %v548
        %574 = vmatpush1.bf16.msra.mxu0 %v547
        %575 = vmatprep.subr.bf16.mxu0 %v546
        %576 = vmatpush1.bf16.msra.mxu0 %v545
        %577 = vmatprep.subr.bf16.mxu0 %v544
        %578 = vmatpush1.bf16.msra.mxu0 %v543
        %579 = vmatprep.subr.bf16.mxu0 %v542
        %580 = vmatpush1.bf16.msra.mxu0 %v541
        %581 = vmatprep.subr.bf16.mxu0 %v540
        %582 = vmatpush1.bf16.msra.mxu0 %v539
        %583 = vmatprep.subr.bf16.mxu0 %v538
        %584 = vmatpush1.bf16.msra.mxu0 %v537
        %585 = vmatprep.subr.bf16.mxu0 0
        %586 = vmatpush2.bf16.msra.mxu0 0
        %587 = vmatprep.subr.bf16.mxu0 0
        %588 = vmatpush2.bf16.msra.mxu0 0
        %589 = vmatprep.subr.bf16.mxu0 0
        %590 = vmatpush2.bf16.msra.mxu0 0
        %591 = vmatprep.subr.bf16.mxu0 0
        %592 = vmatpush2.bf16.msra.mxu0 0
        %593 = vmatprep.subr.bf16.mxu0 0
        %594 = vmatpush2.bf16.msra.mxu0 0
        %595 = vmatprep.subr.bf16.mxu0 0
        %596 = vmatpush2.bf16.msra.mxu0 0
        %597 = vmatprep.subr.bf16.mxu0 0
        %598 = vmatpush2.bf16.msra.mxu0 0
        %599 = vmatprep.subr.bf16.mxu0 0
        %600 = vmatpush2.bf16.msra.mxu0 0
        %601 = vmatprep.mubr.bf16.mxu0 0
        %602 = vmatmul.mubr.bf16.gmra.mxu0 %v565
        %v603 = vpop.f32.mrf.mxu0
        %v604 = vadd.f32 0.0, %v603
        %v605 = vpop.f32.mrf.mxu0
        %v606 = vadd.f32 0.0, %v605
        %v607 = vpop.f32.mrf.mxu0
        %v608 = vadd.f32 0.0, %v607
        %v609 = vpop.f32.mrf.mxu0
        %v610 = vadd.f32 0.0, %v609
        %611 = vmatprep.mubr.bf16.mxu0 0
        %612 = vmatmul.mubr.bf16.gmra.mxu0 %v566
        %v613 = vpop.f32.mrf.mxu0
        %v614 = vadd.f32 0.0, %v613
        %v615 = vpop.f32.mrf.mxu0
        %v616 = vadd.f32 0.0, %v615
        %v617 = vpop.f32.mrf.mxu0
        %v618 = vadd.f32 0.0, %v617
        %v619 = vpop.f32.mrf.mxu0
        %v620 = vadd.f32 0.0, %v619
        %621 = vdwg.mxu0
        %v622 = vld [vmem:[%s3] sm:$0xf]
        %v623 = vld [vmem:[%s3 + $0x4] sm:$0xf]
        %v624 = vld [vmem:[%s3 + $0x8] sm:$0xf]
        %v625 = vld [vmem:[%s3 + $0xc] sm:$0xf]
        %v626 = vld [vmem:[%s3 + $0x10] sm:$0xf]
        %v627 = vld [vmem:[%s3 + $0x14] sm:$0xf]
        %v628 = vld [vmem:[%s3 + $0x18] sm:$0xf]
        %v629 = vld [vmem:[%s3 + $0x1c] sm:$0xf]
        %v630 = vld [vmem:[%s3 + $0x20] sm:$0xf]
        %v631 = vld [vmem:[%s3 + $0x24] sm:$0xf]
        %v632 = vld [vmem:[%s3 + $0x28] sm:$0xf]
        %v633 = vld [vmem:[%s3 + $0x2c] sm:$0xf]
        %v634 = vld [vmem:[%s3 + $0x30] sm:$0xf]
        %v635 = vld [vmem:[%s3 + $0x34] sm:$0xf]
        %v636 = vld [vmem:[%s3 + $0x38] sm:$0xf]
        %v637 = vld [vmem:[%s3 + $0x3c] sm:$0xf]
        %v638 = vld [vmem:[%s4] sm:$0xff]
        %v639 = vld [vmem:[%s4 + $0x8] sm:$0xff]
        %v640 = vld [vmem:[%s4 + $0x10] sm:$0xff]
        %v641 = vld [vmem:[%s4 + $0x18] sm:$0xff]
        %v642 = vld [vmem:[%s4 + $0x20] sm:$0xff]
        %v643 = vld [vmem:[%s4 + $0x28] sm:$0xff]
        %v644 = vld [vmem:[%s4 + $0x30] sm:$0xff]
        %v645 = vld [vmem:[%s4 + $0x38] sm:$0xff]
        %v646 = vld [vmem:[%s4 + $0x40] sm:$0xff]
        %v647 = vld [vmem:[%s4 + $0x48] sm:$0xff]
        %v648 = vld [vmem:[%s4 + $0x50] sm:$0xff]
        %v649 = vld [vmem:[%s4 + $0x58] sm:$0xff]
        %v650 = vld [vmem:[%s4 + $0x60] sm:$0xff]
        %v651 = vld [vmem:[%s4 + $0x68] sm:$0xff]
        %v652 = vld [vmem:[%s4 + $0x70] sm:$0xff]
        %v653 = vld [vmem:[%s4 + $0x78] sm:$0xff]
        %655 = vset.pattern.permute.xlu0 0
        %656 = vperm.xlu0 %655, %v638
        %v657 = vpop.permute.xlu0 %656
        %660 = vset.pattern.permute.xlu0 0
        %661 = vperm.xlu0 %660, %v639
        %v662 = vpop.permute.xlu0 %661
        %665 = vset.pattern.permute.xlu0 0
        %666 = vperm.xlu0 %665, %v640
        %v667 = vpop.permute.xlu0 %666
        %670 = vset.pattern.permute.xlu0 0
        %671 = vperm.xlu0 %670, %v641
        %v672 = vpop.permute.xlu0 %671
        %675 = vset.pattern.permute.xlu0 0
        %676 = vperm.xlu0 %675, %v642
        %v677 = vpop.permute.xlu0 %676
        %680 = vset.pattern.permute.xlu0 0
        %681 = vperm.xlu0 %680, %v643
        %v682 = vpop.permute.xlu0 %681
        %685 = vset.pattern.permute.xlu0 0
        %686 = vperm.xlu0 %685, %v644
        %v687 = vpop.permute.xlu0 %686
        %690 = vset.pattern.permute.xlu0 0
        %691 = vperm.xlu0 %690, %v645
        %v692 = vpop.permute.xlu0 %691
        %695 = vset.pattern.permute.xlu0 0
        %696 = vperm.xlu0 %695, %v646
        %v697 = vpop.permute.xlu0 %696
        %700 = vset.pattern.permute.xlu0 0
        %701 = vperm.xlu0 %700, %v647
        %v702 = vpop.permute.xlu0 %701
        %705 = vset.pattern.permute.xlu0 0
        %706 = vperm.xlu0 %705, %v648
        %v707 = vpop.permute.xlu0 %706
        %710 = vset.pattern.permute.xlu0 0
        %711 = vperm.xlu0 %710, %v649
        %v712 = vpop.permute.xlu0 %711
        %715 = vset.pattern.permute.xlu0 0
        %716 = vperm.xlu0 %715, %v650
        %v717 = vpop.permute.xlu0 %716
        %720 = vset.pattern.permute.xlu0 0
        %721 = vperm.xlu0 %720, %v651
        %v722 = vpop.permute.xlu0 %721
        %725 = vset.pattern.permute.xlu0 0
        %726 = vperm.xlu0 %725, %v652
        %v727 = vpop.permute.xlu0 %726
        %730 = vset.pattern.permute.xlu0 0
        %731 = vperm.xlu0 %730, %v653
        %v732 = vpop.permute.xlu0 %731
        %v750 = vunpack.c.l.b16 %v622
        %v751 = vunpack.c.l.b16 %v623
        %v752 = vunpack.c.l.b16 %v624
        %v753 = vunpack.c.l.b16 %v625
        %v754 = vunpack.c.l.b16 %v626
        %v755 = vunpack.c.l.b16 %v627
        %v756 = vunpack.c.l.b16 %v628
        %v757 = vunpack.c.l.b16 %v629
        %v758 = vunpack.c.l.b16 %v630
        %v759 = vunpack.c.l.b16 %v631
        %v760 = vunpack.c.l.b16 %v632
        %v761 = vunpack.c.l.b16 %v633
        %v762 = vunpack.c.l.b16 %v634
        %v763 = vunpack.c.l.b16 %v635
        %v764 = vunpack.c.l.b16 %v636
        %v765 = vunpack.c.l.b16 %v637
        %v766 = vpack.c.b16 %v751, %v750
        %v767 = vpack.c.b16 %v753, %v752
        %v768 = vpack.c.b16 %v755, %v754
        %v769 = vpack.c.b16 %v757, %v756
        %v770 = vpack.c.b16 %v759, %v758
        %v771 = vpack.c.b16 %v761, %v760
        %v772 = vpack.c.b16 %v763, %v762
        %v773 = vpack.c.b16 %v765, %v764
        %782 = vmatprep.subr.bf16.mxu0 %v552
        %783 = vmatpush1.bf16.msra.mxu0 %v551
        %784 = vmatprep.subr.bf16.mxu0 %v550
        %785 = vmatpush1.bf16.msra.mxu0 %v549
        %786 = vmatprep.subr.bf16.mxu0 %v548
        %787 = vmatpush1.bf16.msra.mxu0 %v547
        %788 = vmatprep.subr.bf16.mxu0 %v546
        %789 = vmatpush1.bf16.msra.mxu0 %v545
        %790 = vmatprep.subr.bf16.mxu0 %v544
        %791 = vmatpush1.bf16.msra.mxu0 %v543
        %792 = vmatprep.subr.bf16.mxu0 %v542
        %793 = vmatpush1.bf16.msra.mxu0 %v541
        %794 = vmatprep.subr.bf16.mxu0 %v540
        %795 = vmatpush1.bf16.msra.mxu0 %v539
        %796 = vmatprep.subr.bf16.mxu0 %v538
        %797 = vmatpush1.bf16.msra.mxu0 %v537
        %798 = vmatprep.subr.bf16.mxu0 0
        %799 = vmatpush2.bf16.msra.mxu0 0
        %800 = vmatprep.subr.bf16.mxu0 0
        %801 = vmatpush2.bf16.msra.mxu0 0
        %802 = vmatprep.subr.bf16.mxu0 0
        %803 = vmatpush2.bf16.msra.mxu0 0
        %804 = vmatprep.subr.bf16.mxu0 0
        %805 = vmatpush2.bf16.msra.mxu0 0
        %806 = vmatprep.subr.bf16.mxu0 0
        %807 = vmatpush2.bf16.msra.mxu0 0
        %808 = vmatprep.subr.bf16.mxu0 0
        %809 = vmatpush2.bf16.msra.mxu0 0
        %810 = vmatprep.subr.bf16.mxu0 0
        %811 = vmatpush2.bf16.msra.mxu0 0
        %812 = vmatprep.subr.bf16.mxu0 0
        %813 = vmatpush2.bf16.msra.mxu0 0
        %814 = vmatprep.mubr.bf16.mxu0 0
        %815 = vmatmul.mubr.bf16.gmra.mxu0 %v766
        %v816 = vpop.f32.mrf.mxu0
        %v817 = vadd.f32 %v657, %v816
        %v818 = vpop.f32.mrf.mxu0
        %v819 = vadd.f32 %v657, %v818
        %v820 = vpop.f32.mrf.mxu0
        %v821 = vadd.f32 %v662, %v820
        %v822 = vpop.f32.mrf.mxu0
        %v823 = vadd.f32 %v662, %v822
        %824 = vmatprep.mubr.bf16.mxu0 0
        %825 = vmatmul.mubr.bf16.gmra.mxu0 %v767
        %v826 = vpop.f32.mrf.mxu0
        %v827 = vadd.f32 %v667, %v826
        %v828 = vpop.f32.mrf.mxu0
        %v829 = vadd.f32 %v667, %v828
        %v830 = vpop.f32.mrf.mxu0
        %v831 = vadd.f32 %v672, %v830
        %v832 = vpop.f32.mrf.mxu0
        %v833 = vadd.f32 %v672, %v832
        %834 = vmatprep.mubr.bf16.mxu0 0
        %835 = vmatmul.mubr.bf16.gmra.mxu0 %v768
        %v836 = vpop.f32.mrf.mxu0
        %v837 = vadd.f32 %v677, %v836
        %v838 = vpop.f32.mrf.mxu0
        %v839 = vadd.f32 %v677, %v838
        %v840 = vpop.f32.mrf.mxu0
        %v841 = vadd.f32 %v682, %v840
        %v842 = vpop.f32.mrf.mxu0
        %v843 = vadd.f32 %v682, %v842
        %844 = vmatprep.mubr.bf16.mxu0 0
        %845 = vmatmul.mubr.bf16.gmra.mxu0 %v769
        %v846 = vpop.f32.mrf.mxu0
        %v847 = vadd.f32 %v687, %v846
        %v848 = vpop.f32.mrf.mxu0
        %v849 = vadd.f32 %v687, %v848
        %v850 = vpop.f32.mrf.mxu0
        %v851 = vadd.f32 %v692, %v850
        %v852 = vpop.f32.mrf.mxu0
        %v853 = vadd.f32 %v692, %v852
        %854 = vmatprep.mubr.bf16.mxu0 0
        %855 = vmatmul.mubr.bf16.gmra.mxu0 %v770
        %v856 = vpop.f32.mrf.mxu0
        %v857 = vadd.f32 %v697, %v856
        %v858 = vpop.f32.mrf.mxu0
        %v859 = vadd.f32 %v697, %v858
        %v860 = vpop.f32.mrf.mxu0
        %v861 = vadd.f32 %v702, %v860
        %v862 = vpop.f32.mrf.mxu0
        %v863 = vadd.f32 %v702, %v862
        %864 = vmatprep.mubr.bf16.mxu0 0
        %865 = vmatmul.mubr.bf16.gmra.mxu0 %v771
        %v866 = vpop.f32.mrf.mxu0
        %v867 = vadd.f32 %v707, %v866
        %v868 = vpop.f32.mrf.mxu0
        %v869 = vadd.f32 %v707, %v868
        %v870 = vpop.f32.mrf.mxu0
        %v871 = vadd.f32 %v712, %v870
        %v872 = vpop.f32.mrf.mxu0
        %v873 = vadd.f32 %v712, %v872
        %874 = vmatprep.mubr.bf16.mxu0 0
        %875 = vmatmul.mubr.bf16.gmra.mxu0 %v772
        %v876 = vpop.f32.mrf.mxu0
        %v877 = vadd.f32 %v717, %v876
        %v878 = vpop.f32.mrf.mxu0
        %v879 = vadd.f32 %v717, %v878
        %v880 = vpop.f32.mrf.mxu0
        %v881 = vadd.f32 %v722, %v880
        %v882 = vpop.f32.mrf.mxu0
        %v883 = vadd.f32 %v722, %v882
        %884 = vmatprep.mubr.bf16.mxu0 0
        %885 = vmatmul.mubr.bf16.gmra.mxu0 %v773
        %v886 = vpop.f32.mrf.mxu0
        %v887 = vadd.f32 %v727, %v886
        %v888 = vpop.f32.mrf.mxu0
        %v889 = vadd.f32 %v727, %v888
        %v890 = vpop.f32.mrf.mxu0
        %v891 = vadd.f32 %v732, %v890
        %v892 = vpop.f32.mrf.mxu0
        %v893 = vadd.f32 %v732, %v892
        %894 = vdwg.mxu0
        %v895 = vpack.c.bf16 %v608, %v604
        %v896 = vpack.c.bf16 %v610, %v606
        %v897 = vpack.c.bf16 %v618, %v614
        %v898 = vpack.c.bf16 %v620, %v616
        %v899 = vld [vmem:[#allocation2] sm:$0xff]
        %v900 = vld [vmem:[#allocation2 + $0x8] sm:$0xff]
        %v901 = vld [vmem:[#allocation2 + $0x10] sm:$0xff]
        %v902 = vld [vmem:[#allocation2 + $0x18] sm:$0xff]
        %903 = vxpose.xlu0.c.b16.start [1/8] %v895, 128
        %904 = vxpose.xlu0.c.b16.cont [2/8] %v897, 128
        %905 = vxpose.xlu0.c.b16.cont [3/8] 0, 128
        %906 = vxpose.xlu0.c.b16.cont [4/8] 0, 128
        %907 = vxpose.xlu0.c.b16.cont [5/8] 0, 128
        %908 = vxpose.xlu0.c.b16.cont [6/8] 0, 128
        %909 = vxpose.xlu0.c.b16.cont [7/8] 0, 128
        %910 = vxpose.xlu0.c.b16.end [8/8] 0, 128
        %v911 = vpop.trf.xlu0
        %v912 = vpop.trf.xlu0
        %v913 = vpop.trf.xlu0
        %v914 = vpop.trf.xlu0
        %v915 = vpop.trf.xlu0
        %v916 = vpop.trf.xlu0
        %v917 = vpop.trf.xlu0
        %v918 = vpop.trf.xlu0
        %919 = vxpose.xlu0.c.b16.start [1/8] %v896, 128
        %920 = vxpose.xlu0.c.b16.cont [2/8] %v898, 128
        %921 = vxpose.xlu0.c.b16.cont [3/8] 0, 128
        %922 = vxpose.xlu0.c.b16.cont [4/8] 0, 128
        %923 = vxpose.xlu0.c.b16.cont [5/8] 0, 128
        %924 = vxpose.xlu0.c.b16.cont [6/8] 0, 128
        %925 = vxpose.xlu0.c.b16.cont [7/8] 0, 128
        %926 = vxpose.xlu0.c.b16.end [8/8] 0, 128
        %v927 = vpop.trf.xlu0
        %v928 = vpop.trf.xlu0
        %v929 = vpop.trf.xlu0
        %v930 = vpop.trf.xlu0
        %v931 = vpop.trf.xlu0
        %v932 = vpop.trf.xlu0
        %v933 = vpop.trf.xlu0
        %v934 = vpop.trf.xlu0
        %v939 = vunpack.c.l.b16 %v899
        %v940 = vunpack.c.h.b16 %v899
        %v941 = vunpack.c.l.b16 %v900
        %v942 = vunpack.c.h.b16 %v900
        %v943 = vunpack.c.l.b16 %v901
        %v944 = vunpack.c.h.b16 %v901
        %v945 = vunpack.c.l.b16 %v902
        %v946 = vunpack.c.h.b16 %v902
        %v947 = vpack.c.b16 %v941, %v939
        %v948 = vpack.c.b16 %v942, %v940
        %v949 = vpack.c.b16 %v945, %v943
        %v950 = vpack.c.b16 %v946, %v944
        %vm955 = vcmask 261120
        %v957 = vsel %vm955, %v911, 0
        %v960 = vsel %vm955, %v912, 0
        %v963 = vsel %vm955, %v913, 0
        %v966 = vsel %vm955, %v914, 0
        %v969 = vsel %vm955, %v915, 0
        %v972 = vsel %vm955, %v916, 0
        %v975 = vsel %vm955, %v917, 0
        %v978 = vsel %vm955, %v918, 0
        %v981 = vsel %vm955, %v927, 0
        %v984 = vsel %vm955, %v928, 0
        %v987 = vsel %vm955, %v929, 0
        %v990 = vsel %vm955, %v930, 0
        %v993 = vsel %vm955, %v931, 0
        %v996 = vsel %vm955, %v932, 0
        %v999 = vsel %vm955, %v933, 0
        %v1002 = vsel %vm955, %v934, 0
        %1004 = vmatprep.subr.bf16.mxu0 0
        %1005 = vmatpush1.bf16.msra.mxu0 0
        %1006 = vmatprep.subr.bf16.mxu0 0
        %1007 = vmatpush1.bf16.msra.mxu0 0
        %1008 = vmatprep.subr.bf16.mxu0 0
        %1009 = vmatpush1.bf16.msra.mxu0 0
        %1010 = vmatprep.subr.bf16.mxu0 0
        %1011 = vmatpush1.bf16.msra.mxu0 0
        %1012 = vmatprep.subr.bf16.mxu0 0
        %1013 = vmatpush1.bf16.msra.mxu0 0
        %1014 = vmatprep.subr.bf16.mxu0 0
        %1015 = vmatpush1.bf16.msra.mxu0 0
        %1016 = vmatprep.subr.bf16.mxu0 %v950
        %1017 = vmatpush1.bf16.msra.mxu0 %v949
        %1018 = vmatprep.subr.bf16.mxu0 %v948
        %1019 = vmatpush1.bf16.msra.mxu0 %v947
        %1020 = vmatprep.subr.bf16.mxu0 0
        %1021 = vmatpush2.bf16.msra.mxu0 0
        %1022 = vmatprep.subr.bf16.mxu0 0
        %1023 = vmatpush2.bf16.msra.mxu0 0
        %1024 = vmatprep.subr.bf16.mxu0 0
        %1025 = vmatpush2.bf16.msra.mxu0 0
        %1026 = vmatprep.subr.bf16.mxu0 0
        %1027 = vmatpush2.bf16.msra.mxu0 0
        %1028 = vmatprep.subr.bf16.mxu0 0
        %1029 = vmatpush2.bf16.msra.mxu0 0
        %1030 = vmatprep.subr.bf16.mxu0 0
        %1031 = vmatpush2.bf16.msra.mxu0 0
        %1032 = vmatprep.subr.bf16.mxu0 0
        %1033 = vmatpush2.bf16.msra.mxu0 0
        %1034 = vmatprep.subr.bf16.mxu0 0
        %1035 = vmatpush2.bf16.msra.mxu0 0
        %1036 = vmatprep.mubr.bf16.mxu0 0
        %1037 = vmatmul.mubr.bf16.gmra.mxu0 %v957
        %v1038 = vpop.f32.mrf.mxu0
        %v1039 = vadd.f32 0.0, %v1038
        %v1040 = vpop.f32.mrf.mxu0
        %v1041 = vadd.f32 0.0, %v1040
        %v1042 = vpop.f32.mrf.mxu0
        %v1043 = vadd.f32 0.0, %v1042
        %v1044 = vpop.f32.mrf.mxu0
        %v1045 = vadd.f32 0.0, %v1044
        %1046 = vmatprep.mubr.bf16.mxu0 0
        %1047 = vmatmul.mubr.bf16.gmra.mxu0 %v960
        %v1048 = vpop.f32.mrf.mxu0
        %v1049 = vadd.f32 0.0, %v1048
        %v1050 = vpop.f32.mrf.mxu0
        %v1051 = vadd.f32 0.0, %v1050
        %v1052 = vpop.f32.mrf.mxu0
        %v1053 = vadd.f32 0.0, %v1052
        %v1054 = vpop.f32.mrf.mxu0
        %v1055 = vadd.f32 0.0, %v1054
        %1056 = vmatprep.mubr.bf16.mxu0 0
        %1057 = vmatmul.mubr.bf16.gmra.mxu0 %v963
        %v1058 = vpop.f32.mrf.mxu0
        %v1059 = vadd.f32 0.0, %v1058
        %v1060 = vpop.f32.mrf.mxu0
        %v1061 = vadd.f32 0.0, %v1060
        %v1062 = vpop.f32.mrf.mxu0
        %v1063 = vadd.f32 0.0, %v1062
        %v1064 = vpop.f32.mrf.mxu0
        %v1065 = vadd.f32 0.0, %v1064
        %1066 = vmatprep.mubr.bf16.mxu0 0
        %1067 = vmatmul.mubr.bf16.gmra.mxu0 %v966
        %v1068 = vpop.f32.mrf.mxu0
        %v1069 = vadd.f32 0.0, %v1068
        %v1070 = vpop.f32.mrf.mxu0
        %v1071 = vadd.f32 0.0, %v1070
        %v1072 = vpop.f32.mrf.mxu0
        %v1073 = vadd.f32 0.0, %v1072
        %v1074 = vpop.f32.mrf.mxu0
        %v1075 = vadd.f32 0.0, %v1074
        %1076 = vmatprep.mubr.bf16.mxu0 0
        %1077 = vmatmul.mubr.bf16.gmra.mxu0 %v969
        %v1078 = vpop.f32.mrf.mxu0
        %v1079 = vadd.f32 0.0, %v1078
        %v1080 = vpop.f32.mrf.mxu0
        %v1081 = vadd.f32 0.0, %v1080
        %v1082 = vpop.f32.mrf.mxu0
        %v1083 = vadd.f32 0.0, %v1082
        %v1084 = vpop.f32.mrf.mxu0
        %v1085 = vadd.f32 0.0, %v1084
        %1086 = vmatprep.mubr.bf16.mxu0 0
        %1087 = vmatmul.mubr.bf16.gmra.mxu0 %v972
        %v1088 = vpop.f32.mrf.mxu0
        %v1089 = vadd.f32 0.0, %v1088
        %v1090 = vpop.f32.mrf.mxu0
        %v1091 = vadd.f32 0.0, %v1090
        %v1092 = vpop.f32.mrf.mxu0
        %v1093 = vadd.f32 0.0, %v1092
        %v1094 = vpop.f32.mrf.mxu0
        %v1095 = vadd.f32 0.0, %v1094
        %1096 = vmatprep.mubr.bf16.mxu0 0
        %1097 = vmatmul.mubr.bf16.gmra.mxu0 %v975
        %v1098 = vpop.f32.mrf.mxu0
        %v1099 = vadd.f32 0.0, %v1098
        %v1100 = vpop.f32.mrf.mxu0
        %v1101 = vadd.f32 0.0, %v1100
        %v1102 = vpop.f32.mrf.mxu0
        %v1103 = vadd.f32 0.0, %v1102
        %v1104 = vpop.f32.mrf.mxu0
        %v1105 = vadd.f32 0.0, %v1104
        %1106 = vmatprep.mubr.bf16.mxu0 0
        %1107 = vmatmul.mubr.bf16.gmra.mxu0 %v978
        %v1108 = vpop.f32.mrf.mxu0
        %v1109 = vadd.f32 0.0, %v1108
        %v1110 = vpop.f32.mrf.mxu0
        %v1111 = vadd.f32 0.0, %v1110
        %v1112 = vpop.f32.mrf.mxu0
        %v1113 = vadd.f32 0.0, %v1112
        %v1114 = vpop.f32.mrf.mxu0
        %v1115 = vadd.f32 0.0, %v1114
        %1116 = vmatprep.mubr.bf16.mxu0 0
        %1117 = vmatmul.mubr.bf16.gmra.mxu0 %v981
        %v1118 = vpop.f32.mrf.mxu0
        %v1119 = vadd.f32 0.0, %v1118
        %v1120 = vpop.f32.mrf.mxu0
        %v1121 = vadd.f32 0.0, %v1120
        %v1122 = vpop.f32.mrf.mxu0
        %v1123 = vadd.f32 0.0, %v1122
        %v1124 = vpop.f32.mrf.mxu0
        %v1125 = vadd.f32 0.0, %v1124
        %1126 = vmatprep.mubr.bf16.mxu0 0
        %1127 = vmatmul.mubr.bf16.gmra.mxu0 %v984
        %v1128 = vpop.f32.mrf.mxu0
        %v1129 = vadd.f32 0.0, %v1128
        %v1130 = vpop.f32.mrf.mxu0
        %v1131 = vadd.f32 0.0, %v1130
        %v1132 = vpop.f32.mrf.mxu0
        %v1133 = vadd.f32 0.0, %v1132
        %v1134 = vpop.f32.mrf.mxu0
        %v1135 = vadd.f32 0.0, %v1134
        %1136 = vmatprep.mubr.bf16.mxu0 0
        %1137 = vmatmul.mubr.bf16.gmra.mxu0 %v987
        %v1138 = vpop.f32.mrf.mxu0
        %v1139 = vadd.f32 0.0, %v1138
        %v1140 = vpop.f32.mrf.mxu0
        %v1141 = vadd.f32 0.0, %v1140
        %v1142 = vpop.f32.mrf.mxu0
        %v1143 = vadd.f32 0.0, %v1142
        %v1144 = vpop.f32.mrf.mxu0
        %v1145 = vadd.f32 0.0, %v1144
        %1146 = vmatprep.mubr.bf16.mxu0 0
        %1147 = vmatmul.mubr.bf16.gmra.mxu0 %v990
        %v1148 = vpop.f32.mrf.mxu0
        %v1149 = vadd.f32 0.0, %v1148
        %v1150 = vpop.f32.mrf.mxu0
        %v1151 = vadd.f32 0.0, %v1150
        %v1152 = vpop.f32.mrf.mxu0
        %v1153 = vadd.f32 0.0, %v1152
        %v1154 = vpop.f32.mrf.mxu0
        %v1155 = vadd.f32 0.0, %v1154
        %1156 = vmatprep.mubr.bf16.mxu0 0
        %1157 = vmatmul.mubr.bf16.gmra.mxu0 %v993
        %v1158 = vpop.f32.mrf.mxu0
        %v1159 = vadd.f32 0.0, %v1158
        %v1160 = vpop.f32.mrf.mxu0
        %v1161 = vadd.f32 0.0, %v1160
        %v1162 = vpop.f32.mrf.mxu0
        %v1163 = vadd.f32 0.0, %v1162
        %v1164 = vpop.f32.mrf.mxu0
        %v1165 = vadd.f32 0.0, %v1164
        %1166 = vmatprep.mubr.bf16.mxu0 0
        %1167 = vmatmul.mubr.bf16.gmra.mxu0 %v996
        %v1168 = vpop.f32.mrf.mxu0
        %v1169 = vadd.f32 0.0, %v1168
        %v1170 = vpop.f32.mrf.mxu0
        %v1171 = vadd.f32 0.0, %v1170
        %v1172 = vpop.f32.mrf.mxu0
        %v1173 = vadd.f32 0.0, %v1172
        %v1174 = vpop.f32.mrf.mxu0
        %v1175 = vadd.f32 0.0, %v1174
        %1176 = vmatprep.mubr.bf16.mxu0 0
        %1177 = vmatmul.mubr.bf16.gmra.mxu0 %v999
        %v1178 = vpop.f32.mrf.mxu0
        %v1179 = vadd.f32 0.0, %v1178
        %v1180 = vpop.f32.mrf.mxu0
        %v1181 = vadd.f32 0.0, %v1180
        %v1182 = vpop.f32.mrf.mxu0
        %v1183 = vadd.f32 0.0, %v1182
        %v1184 = vpop.f32.mrf.mxu0
        %v1185 = vadd.f32 0.0, %v1184
        %1186 = vmatprep.mubr.bf16.mxu0 0
        %1187 = vmatmul.mubr.bf16.gmra.mxu0 %v1002
        %v1188 = vpop.f32.mrf.mxu0
        %v1189 = vadd.f32 0.0, %v1188
        %v1190 = vpop.f32.mrf.mxu0
        %v1191 = vadd.f32 0.0, %v1190
        %v1192 = vpop.f32.mrf.mxu0
        %v1193 = vadd.f32 0.0, %v1192
        %v1194 = vpop.f32.mrf.mxu0
        %v1195 = vadd.f32 0.0, %v1194
        %1196 = vdwg.mxu0
        %v1197 = vmax.f32 %v1039, %v1041
        %1198 = vmax.xlane.f32.xlu0 %v1197
        %v1199 = vpop.xlane.xlu0 %1198
        %v1200 = vmax.f32 %v1043, %v1045
        %1201 = vmax.xlane.f32.xlu0 %v1200
        %v1202 = vpop.xlane.xlu0 %1201
        %v1203 = vmax.f32 %v1049, %v1051
        %1204 = vmax.xlane.f32.xlu0 %v1203
        %v1205 = vpop.xlane.xlu0 %1204
        %v1206 = vmax.f32 %v1053, %v1055
        %1207 = vmax.xlane.f32.xlu0 %v1206
        %v1208 = vpop.xlane.xlu0 %1207
        %v1209 = vmax.f32 %v1059, %v1061
        %1210 = vmax.xlane.f32.xlu0 %v1209
        %v1211 = vpop.xlane.xlu0 %1210
        %v1212 = vmax.f32 %v1063, %v1065
        %1213 = vmax.xlane.f32.xlu0 %v1212
        %v1214 = vpop.xlane.xlu0 %1213
        %v1215 = vmax.f32 %v1069, %v1071
        %1216 = vmax.xlane.f32.xlu0 %v1215
        %v1217 = vpop.xlane.xlu0 %1216
        %v1218 = vmax.f32 %v1073, %v1075
        %1219 = vmax.xlane.f32.xlu0 %v1218
        %v1220 = vpop.xlane.xlu0 %1219
        %v1221 = vmax.f32 %v1079, %v1081
        %1222 = vmax.xlane.f32.xlu0 %v1221
        %v1223 = vpop.xlane.xlu0 %1222
        %v1224 = vmax.f32 %v1083, %v1085
        %1225 = vmax.xlane.f32.xlu0 %v1224
        %v1226 = vpop.xlane.xlu0 %1225
        %v1227 = vmax.f32 %v1089, %v1091
        %1228 = vmax.xlane.f32.xlu0 %v1227
        %v1229 = vpop.xlane.xlu0 %1228
        %v1230 = vmax.f32 %v1093, %v1095
        %1231 = vmax.xlane.f32.xlu0 %v1230
        %v1232 = vpop.xlane.xlu0 %1231
        %v1233 = vmax.f32 %v1099, %v1101
        %1234 = vmax.xlane.f32.xlu0 %v1233
        %v1235 = vpop.xlane.xlu0 %1234
        %v1236 = vmax.f32 %v1103, %v1105
        %1237 = vmax.xlane.f32.xlu0 %v1236
        %v1238 = vpop.xlane.xlu0 %1237
        %v1239 = vmax.f32 %v1109, %v1111
        %1240 = vmax.xlane.f32.xlu0 %v1239
        %v1241 = vpop.xlane.xlu0 %1240
        %v1242 = vmax.f32 %v1113, %v1115
        %1243 = vmax.xlane.f32.xlu0 %v1242
        %v1244 = vpop.xlane.xlu0 %1243
        %v1245 = vmax.f32 %v1119, %v1121
        %1246 = vmax.xlane.f32.xlu0 %v1245
        %v1247 = vpop.xlane.xlu0 %1246
        %v1248 = vmax.f32 %v1123, %v1125
        %1249 = vmax.xlane.f32.xlu0 %v1248
        %v1250 = vpop.xlane.xlu0 %1249
        %v1251 = vmax.f32 %v1129, %v1131
        %1252 = vmax.xlane.f32.xlu0 %v1251
        %v1253 = vpop.xlane.xlu0 %1252
        %v1254 = vmax.f32 %v1133, %v1135
        %1255 = vmax.xlane.f32.xlu0 %v1254
        %v1256 = vpop.xlane.xlu0 %1255
        %v1257 = vmax.f32 %v1139, %v1141
        %1258 = vmax.xlane.f32.xlu0 %v1257
        %v1259 = vpop.xlane.xlu0 %1258
        %v1260 = vmax.f32 %v1143, %v1145
        %1261 = vmax.xlane.f32.xlu0 %v1260
        %v1262 = vpop.xlane.xlu0 %1261
        %v1263 = vmax.f32 %v1149, %v1151
        %1264 = vmax.xlane.f32.xlu0 %v1263
        %v1265 = vpop.xlane.xlu0 %1264
        %v1266 = vmax.f32 %v1153, %v1155
        %1267 = vmax.xlane.f32.xlu0 %v1266
        %v1268 = vpop.xlane.xlu0 %1267
        %v1269 = vmax.f32 %v1159, %v1161
        %1270 = vmax.xlane.f32.xlu0 %v1269
        %v1271 = vpop.xlane.xlu0 %1270
        %v1272 = vmax.f32 %v1163, %v1165
        %1273 = vmax.xlane.f32.xlu0 %v1272
        %v1274 = vpop.xlane.xlu0 %1273
        %v1275 = vmax.f32 %v1169, %v1171
        %1276 = vmax.xlane.f32.xlu0 %v1275
        %v1277 = vpop.xlane.xlu0 %1276
        %v1278 = vmax.f32 %v1173, %v1175
        %1279 = vmax.xlane.f32.xlu0 %v1278
        %v1280 = vpop.xlane.xlu0 %1279
        %v1281 = vmax.f32 %v1179, %v1181
        %1282 = vmax.xlane.f32.xlu0 %v1281
        %v1283 = vpop.xlane.xlu0 %1282
        %v1284 = vmax.f32 %v1183, %v1185
        %1285 = vmax.xlane.f32.xlu0 %v1284
        %v1286 = vpop.xlane.xlu0 %1285
        %v1287 = vmax.f32 %v1189, %v1191
        %1288 = vmax.xlane.f32.xlu0 %v1287
        %v1289 = vpop.xlane.xlu0 %1288
        %v1290 = vmax.f32 %v1193, %v1195
        %1291 = vmax.xlane.f32.xlu0 %v1290
        %v1292 = vpop.xlane.xlu0 %1291
        %v1293 = vsub.f32 %v1039, %v1199
        %v1294 = vsub.f32 %v1041, %v1199
        %v1295 = vsub.f32 %v1043, %v1202
        %v1296 = vsub.f32 %v1045, %v1202
        %v1297 = vsub.f32 %v1049, %v1205
        %v1298 = vsub.f32 %v1051, %v1205
        %v1299 = vsub.f32 %v1053, %v1208
        %v1300 = vsub.f32 %v1055, %v1208
        %v1301 = vsub.f32 %v1059, %v1211
        %v1302 = vsub.f32 %v1061, %v1211
        %v1303 = vsub.f32 %v1063, %v1214
        %v1304 = vsub.f32 %v1065, %v1214
        %v1305 = vsub.f32 %v1069, %v1217
        %v1306 = vsub.f32 %v1071, %v1217
        %v1307 = vsub.f32 %v1073, %v1220
        %v1308 = vsub.f32 %v1075, %v1220
        %v1309 = vsub.f32 %v1079, %v1223
        %v1310 = vsub.f32 %v1081, %v1223
        %v1311 = vsub.f32 %v1083, %v1226
        %v1312 = vsub.f32 %v1085, %v1226
        %v1313 = vsub.f32 %v1089, %v1229
        %v1314 = vsub.f32 %v1091, %v1229
        %v1315 = vsub.f32 %v1093, %v1232
        %v1316 = vsub.f32 %v1095, %v1232
        %v1317 = vsub.f32 %v1099, %v1235
        %v1318 = vsub.f32 %v1101, %v1235
        %v1319 = vsub.f32 %v1103, %v1238
        %v1320 = vsub.f32 %v1105, %v1238
        %v1321 = vsub.f32 %v1109, %v1241
        %v1322 = vsub.f32 %v1111, %v1241
        %v1323 = vsub.f32 %v1113, %v1244
        %v1324 = vsub.f32 %v1115, %v1244
        %v1325 = vsub.f32 %v1119, %v1247
        %v1326 = vsub.f32 %v1121, %v1247
        %v1327 = vsub.f32 %v1123, %v1250
        %v1328 = vsub.f32 %v1125, %v1250
        %v1329 = vsub.f32 %v1129, %v1253
        %v1330 = vsub.f32 %v1131, %v1253
        %v1331 = vsub.f32 %v1133, %v1256
        %v1332 = vsub.f32 %v1135, %v1256
        %v1333 = vsub.f32 %v1139, %v1259
        %v1334 = vsub.f32 %v1141, %v1259
        %v1335 = vsub.f32 %v1143, %v1262
        %v1336 = vsub.f32 %v1145, %v1262
        %v1337 = vsub.f32 %v1149, %v1265
        %v1338 = vsub.f32 %v1151, %v1265
        %v1339 = vsub.f32 %v1153, %v1268
        %v1340 = vsub.f32 %v1155, %v1268
        %v1341 = vsub.f32 %v1159, %v1271
        %v1342 = vsub.f32 %v1161, %v1271
        %v1343 = vsub.f32 %v1163, %v1274
        %v1344 = vsub.f32 %v1165, %v1274
        %v1345 = vsub.f32 %v1169, %v1277
        %v1346 = vsub.f32 %v1171, %v1277
        %v1347 = vsub.f32 %v1173, %v1280
        %v1348 = vsub.f32 %v1175, %v1280
        %v1349 = vsub.f32 %v1179, %v1283
        %v1350 = vsub.f32 %v1181, %v1283
        %v1351 = vsub.f32 %v1183, %v1286
        %v1352 = vsub.f32 %v1185, %v1286
        %v1353 = vsub.f32 %v1189, %v1289
        %v1354 = vsub.f32 %v1191, %v1289
        %v1355 = vsub.f32 %v1193, %v1292
        %v1356 = vsub.f32 %v1195, %v1292
        %v1357 = vmul.f32 %v1293, 1.442695
        %v1358 = vpow.pop %v1357
        %v1359 = vmul.f32 %v1294, 1.442695
        %v1360 = vpow.pop %v1359
        %v1361 = vmul.f32 %v1295, 1.442695
        %v1362 = vpow.pop %v1361
        %v1363 = vmul.f32 %v1296, 1.442695
        %v1364 = vpow.pop %v1363
        %v1365 = vmul.f32 %v1297, 1.442695
        %v1366 = vpow.pop %v1365
        %v1367 = vmul.f32 %v1298, 1.442695
        %v1368 = vpow.pop %v1367
        %v1369 = vmul.f32 %v1299, 1.442695
        %v1370 = vpow.pop %v1369
        %v1371 = vmul.f32 %v1300, 1.442695
        %v1372 = vpow.pop %v1371
        %v1373 = vmul.f32 %v1301, 1.442695
        %v1374 = vpow.pop %v1373
        %v1375 = vmul.f32 %v1302, 1.442695
        %v1376 = vpow.pop %v1375
        %v1377 = vmul.f32 %v1303, 1.442695
        %v1378 = vpow.pop %v1377
        %v1379 = vmul.f32 %v1304, 1.442695
        %v1380 = vpow.pop %v1379
        %v1381 = vmul.f32 %v1305, 1.442695
        %v1382 = vpow.pop %v1381
        %v1383 = vmul.f32 %v1306, 1.442695
        %v1384 = vpow.pop %v1383
        %v1385 = vmul.f32 %v1307, 1.442695
        %v1386 = vpow.pop %v1385
        %v1387 = vmul.f32 %v1308, 1.442695
        %v1388 = vpow.pop %v1387
        %v1389 = vmul.f32 %v1309, 1.442695
        %v1390 = vpow.pop %v1389
        %v1391 = vmul.f32 %v1310, 1.442695
        %v1392 = vpow.pop %v1391
        %v1393 = vmul.f32 %v1311, 1.442695
        %v1394 = vpow.pop %v1393
        %v1395 = vmul.f32 %v1312, 1.442695
        %v1396 = vpow.pop %v1395
        %v1397 = vmul.f32 %v1313, 1.442695
        %v1398 = vpow.pop %v1397
        %v1399 = vmul.f32 %v1314, 1.442695
        %v1400 = vpow.pop %v1399
        %v1401 = vmul.f32 %v1315, 1.442695
        %v1402 = vpow.pop %v1401
        %v1403 = vmul.f32 %v1316, 1.442695
        %v1404 = vpow.pop %v1403
        %v1405 = vmul.f32 %v1317, 1.442695
        %v1406 = vpow.pop %v1405
        %v1407 = vmul.f32 %v1318, 1.442695
        %v1408 = vpow.pop %v1407
        %v1409 = vmul.f32 %v1319, 1.442695
        %v1410 = vpow.pop %v1409
        %v1411 = vmul.f32 %v1320, 1.442695
        %v1412 = vpow.pop %v1411
        %v1413 = vmul.f32 %v1321, 1.442695
        %v1414 = vpow.pop %v1413
        %v1415 = vmul.f32 %v1322, 1.442695
        %v1416 = vpow.pop %v1415
        %v1417 = vmul.f32 %v1323, 1.442695
        %v1418 = vpow.pop %v1417
        %v1419 = vmul.f32 %v1324, 1.442695
        %v1420 = vpow.pop %v1419
        %v1421 = vmul.f32 %v1325, 1.442695
        %v1422 = vpow.pop %v1421
        %v1423 = vmul.f32 %v1326, 1.442695
        %v1424 = vpow.pop %v1423
        %v1425 = vmul.f32 %v1327, 1.442695
        %v1426 = vpow.pop %v1425
        %v1427 = vmul.f32 %v1328, 1.442695
        %v1428 = vpow.pop %v1427
        %v1429 = vmul.f32 %v1329, 1.442695
        %v1430 = vpow.pop %v1429
        %v1431 = vmul.f32 %v1330, 1.442695
        %v1432 = vpow.pop %v1431
        %v1433 = vmul.f32 %v1331, 1.442695
        %v1434 = vpow.pop %v1433
        %v1435 = vmul.f32 %v1332, 1.442695
        %v1436 = vpow.pop %v1435
        %v1437 = vmul.f32 %v1333, 1.442695
        %v1438 = vpow.pop %v1437
        %v1439 = vmul.f32 %v1334, 1.442695
        %v1440 = vpow.pop %v1439
        %v1441 = vmul.f32 %v1335, 1.442695
        %v1442 = vpow.pop %v1441
        %v1443 = vmul.f32 %v1336, 1.442695
        %v1444 = vpow.pop %v1443
        %v1445 = vmul.f32 %v1337, 1.442695
        %v1446 = vpow.pop %v1445
        %v1447 = vmul.f32 %v1338, 1.442695
        %v1448 = vpow.pop %v1447
        %v1449 = vmul.f32 %v1339, 1.442695
        %v1450 = vpow.pop %v1449
        %v1451 = vmul.f32 %v1340, 1.442695
        %v1452 = vpow.pop %v1451
        %v1453 = vmul.f32 %v1341, 1.442695
        %v1454 = vpow.pop %v1453
        %v1455 = vmul.f32 %v1342, 1.442695
        %v1456 = vpow.pop %v1455
        %v1457 = vmul.f32 %v1343, 1.442695
        %v1458 = vpow.pop %v1457
        %v1459 = vmul.f32 %v1344, 1.442695
        %v1460 = vpow.pop %v1459
        %v1461 = vmul.f32 %v1345, 1.442695
        %v1462 = vpow.pop %v1461
        %v1463 = vmul.f32 %v1346, 1.442695
        %v1464 = vpow.pop %v1463
        %v1465 = vmul.f32 %v1347, 1.442695
        %v1466 = vpow.pop %v1465
        %v1467 = vmul.f32 %v1348, 1.442695
        %v1468 = vpow.pop %v1467
        %v1469 = vmul.f32 %v1349, 1.442695
        %v1470 = vpow.pop %v1469
        %v1471 = vmul.f32 %v1350, 1.442695
        %v1472 = vpow.pop %v1471
        %v1473 = vmul.f32 %v1351, 1.442695
        %v1474 = vpow.pop %v1473
        %v1475 = vmul.f32 %v1352, 1.442695
        %v1476 = vpow.pop %v1475
        %v1477 = vmul.f32 %v1353, 1.442695
        %v1478 = vpow.pop %v1477
        %v1479 = vmul.f32 %v1354, 1.442695
        %v1480 = vpow.pop %v1479
        %v1481 = vmul.f32 %v1355, 1.442695
        %v1482 = vpow.pop %v1481
        %v1483 = vmul.f32 %v1356, 1.442695
        %v1484 = vpow.pop %v1483
        %v1485 = vadd.f32 %v1358, %v1360
        %1486 = vadd.xlane.f32.xlu0 %v1485
        %v1487 = vpop.xlane.xlu0 %1486
        %v1488 = vadd.f32 %v1362, %v1364
        %1489 = vadd.xlane.f32.xlu0 %v1488
        %v1490 = vpop.xlane.xlu0 %1489
        %v1491 = vadd.f32 %v1366, %v1368
        %1492 = vadd.xlane.f32.xlu0 %v1491
        %v1493 = vpop.xlane.xlu0 %1492
        %v1494 = vadd.f32 %v1370, %v1372
        %1495 = vadd.xlane.f32.xlu0 %v1494
        %v1496 = vpop.xlane.xlu0 %1495
        %v1497 = vadd.f32 %v1374, %v1376
        %1498 = vadd.xlane.f32.xlu0 %v1497
        %v1499 = vpop.xlane.xlu0 %1498
        %v1500 = vadd.f32 %v1378, %v1380
        %1501 = vadd.xlane.f32.xlu0 %v1500
        %v1502 = vpop.xlane.xlu0 %1501
        %v1503 = vadd.f32 %v1382, %v1384
        %1504 = vadd.xlane.f32.xlu0 %v1503
        %v1505 = vpop.xlane.xlu0 %1504
        %v1506 = vadd.f32 %v1386, %v1388
        %1507 = vadd.xlane.f32.xlu0 %v1506
        %v1508 = vpop.xlane.xlu0 %1507
        %v1509 = vadd.f32 %v1390, %v1392
        %1510 = vadd.xlane.f32.xlu0 %v1509
        %v1511 = vpop.xlane.xlu0 %1510
        %v1512 = vadd.f32 %v1394, %v1396
        %1513 = vadd.xlane.f32.xlu0 %v1512
        %v1514 = vpop.xlane.xlu0 %1513
        %v1515 = vadd.f32 %v1398, %v1400
        %1516 = vadd.xlane.f32.xlu0 %v1515
        %v1517 = vpop.xlane.xlu0 %1516
        %v1518 = vadd.f32 %v1402, %v1404
        %1519 = vadd.xlane.f32.xlu0 %v1518
        %v1520 = vpop.xlane.xlu0 %1519
        %v1521 = vadd.f32 %v1406, %v1408
        %1522 = vadd.xlane.f32.xlu0 %v1521
        %v1523 = vpop.xlane.xlu0 %1522
        %v1524 = vadd.f32 %v1410, %v1412
        %1525 = vadd.xlane.f32.xlu0 %v1524
        %v1526 = vpop.xlane.xlu0 %1525
        %v1527 = vadd.f32 %v1414, %v1416
        %1528 = vadd.xlane.f32.xlu0 %v1527
        %v1529 = vpop.xlane.xlu0 %1528
        %v1530 = vadd.f32 %v1418, %v1420
        %1531 = vadd.xlane.f32.xlu0 %v1530
        %v1532 = vpop.xlane.xlu0 %1531
        %v1533 = vadd.f32 %v1422, %v1424
        %1534 = vadd.xlane.f32.xlu0 %v1533
        %v1535 = vpop.xlane.xlu0 %1534
        %v1536 = vadd.f32 %v1426, %v1428
        %1537 = vadd.xlane.f32.xlu0 %v1536
        %v1538 = vpop.xlane.xlu0 %1537
        %v1539 = vadd.f32 %v1430, %v1432
        %1540 = vadd.xlane.f32.xlu0 %v1539
        %v1541 = vpop.xlane.xlu0 %1540
        %v1542 = vadd.f32 %v1434, %v1436
        %1543 = vadd.xlane.f32.xlu0 %v1542
        %v1544 = vpop.xlane.xlu0 %1543
        %v1545 = vadd.f32 %v1438, %v1440
        %1546 = vadd.xlane.f32.xlu0 %v1545
        %v1547 = vpop.xlane.xlu0 %1546
        %v1548 = vadd.f32 %v1442, %v1444
        %1549 = vadd.xlane.f32.xlu0 %v1548
        %v1550 = vpop.xlane.xlu0 %1549
        %v1551 = vadd.f32 %v1446, %v1448
        %1552 = vadd.xlane.f32.xlu0 %v1551
        %v1553 = vpop.xlane.xlu0 %1552
        %v1554 = vadd.f32 %v1450, %v1452
        %1555 = vadd.xlane.f32.xlu0 %v1554
        %v1556 = vpop.xlane.xlu0 %1555
        %v1557 = vadd.f32 %v1454, %v1456
        %1558 = vadd.xlane.f32.xlu0 %v1557
        %v1559 = vpop.xlane.xlu0 %1558
        %v1560 = vadd.f32 %v1458, %v1460
        %1561 = vadd.xlane.f32.xlu0 %v1560
        %v1562 = vpop.xlane.xlu0 %1561
        %v1563 = vadd.f32 %v1462, %v1464
        %1564 = vadd.xlane.f32.xlu0 %v1563
        %v1565 = vpop.xlane.xlu0 %1564
        %v1566 = vadd.f32 %v1466, %v1468
        %1567 = vadd.xlane.f32.xlu0 %v1566
        %v1568 = vpop.xlane.xlu0 %1567
        %v1569 = vadd.f32 %v1470, %v1472
        %1570 = vadd.xlane.f32.xlu0 %v1569
        %v1571 = vpop.xlane.xlu0 %1570
        %v1572 = vadd.f32 %v1474, %v1476
        %1573 = vadd.xlane.f32.xlu0 %v1572
        %v1574 = vpop.xlane.xlu0 %1573
        %v1575 = vadd.f32 %v1478, %v1480
        %1576 = vadd.xlane.f32.xlu0 %v1575
        %v1577 = vpop.xlane.xlu0 %1576
        %v1578 = vadd.f32 %v1482, %v1484
        %1579 = vadd.xlane.f32.xlu0 %v1578
        %v1580 = vpop.xlane.xlu0 %1579
        %v1581 = vrcp.pop %v1487
        %v1582 = vrcp.pop %v1490
        %v1583 = vrcp.pop %v1493
        %v1584 = vrcp.pop %v1496
        %v1585 = vrcp.pop %v1499
        %v1586 = vrcp.pop %v1502
        %v1587 = vrcp.pop %v1505
        %v1588 = vrcp.pop %v1508
        %v1589 = vrcp.pop %v1511
        %v1590 = vrcp.pop %v1514
        %v1591 = vrcp.pop %v1517
        %v1592 = vrcp.pop %v1520
        %v1593 = vrcp.pop %v1523
        %v1594 = vrcp.pop %v1526
        %v1595 = vrcp.pop %v1529
        %v1596 = vrcp.pop %v1532
        %v1597 = vrcp.pop %v1535
        %v1598 = vrcp.pop %v1538
        %v1599 = vrcp.pop %v1541
        %v1600 = vrcp.pop %v1544
        %v1601 = vrcp.pop %v1547
        %v1602 = vrcp.pop %v1550
        %v1603 = vrcp.pop %v1553
        %v1604 = vrcp.pop %v1556
        %v1605 = vrcp.pop %v1559
        %v1606 = vrcp.pop %v1562
        %v1607 = vrcp.pop %v1565
        %v1608 = vrcp.pop %v1568
        %v1609 = vrcp.pop %v1571
        %v1610 = vrcp.pop %v1574
        %v1611 = vrcp.pop %v1577
        %v1612 = vrcp.pop %v1580
        %v1613 = vmul.f32 %v1358, %v1581
        %v1614 = vmul.f32 %v1360, %v1581
        %v1615 = vmul.f32 %v1362, %v1582
        %v1616 = vmul.f32 %v1364, %v1582
        %v1617 = vmul.f32 %v1366, %v1583
        %v1618 = vmul.f32 %v1368, %v1583
        %v1619 = vmul.f32 %v1370, %v1584
        %v1620 = vmul.f32 %v1372, %v1584
        %v1621 = vmul.f32 %v1374, %v1585
        %v1622 = vmul.f32 %v1376, %v1585
        %v1623 = vmul.f32 %v1378, %v1586
        %v1624 = vmul.f32 %v1380, %v1586
        %v1625 = vmul.f32 %v1382, %v1587
        %v1626 = vmul.f32 %v1384, %v1587
        %v1627 = vmul.f32 %v1386, %v1588
        %v1628 = vmul.f32 %v1388, %v1588
        %v1629 = vmul.f32 %v1390, %v1589
        %v1630 = vmul.f32 %v1392, %v1589
        %v1631 = vmul.f32 %v1394, %v1590
        %v1632 = vmul.f32 %v1396, %v1590
        %v1633 = vmul.f32 %v1398, %v1591
        %v1634 = vmul.f32 %v1400, %v1591
        %v1635 = vmul.f32 %v1402, %v1592
        %v1636 = vmul.f32 %v1404, %v1592
        %v1637 = vmul.f32 %v1406, %v1593
        %v1638 = vmul.f32 %v1408, %v1593
        %v1639 = vmul.f32 %v1410, %v1594
        %v1640 = vmul.f32 %v1412, %v1594
        %v1641 = vmul.f32 %v1414, %v1595
        %v1642 = vmul.f32 %v1416, %v1595
        %v1643 = vmul.f32 %v1418, %v1596
        %v1644 = vmul.f32 %v1420, %v1596
        %v1645 = vmul.f32 %v1422, %v1597
        %v1646 = vmul.f32 %v1424, %v1597
        %v1647 = vmul.f32 %v1426, %v1598
        %v1648 = vmul.f32 %v1428, %v1598
        %v1649 = vmul.f32 %v1430, %v1599
        %v1650 = vmul.f32 %v1432, %v1599
        %v1651 = vmul.f32 %v1434, %v1600
        %v1652 = vmul.f32 %v1436, %v1600
        %v1653 = vmul.f32 %v1438, %v1601
        %v1654 = vmul.f32 %v1440, %v1601
        %v1655 = vmul.f32 %v1442, %v1602
        %v1656 = vmul.f32 %v1444, %v1602
        %v1657 = vmul.f32 %v1446, %v1603
        %v1658 = vmul.f32 %v1448, %v1603
        %v1659 = vmul.f32 %v1450, %v1604
        %v1660 = vmul.f32 %v1452, %v1604
        %v1661 = vmul.f32 %v1454, %v1605
        %v1662 = vmul.f32 %v1456, %v1605
        %v1663 = vmul.f32 %v1458, %v1606
        %v1664 = vmul.f32 %v1460, %v1606
        %v1665 = vmul.f32 %v1462, %v1607
        %v1666 = vmul.f32 %v1464, %v1607
        %v1667 = vmul.f32 %v1466, %v1608
        %v1668 = vmul.f32 %v1468, %v1608
        %v1669 = vmul.f32 %v1470, %v1609
        %v1670 = vmul.f32 %v1472, %v1609
        %v1671 = vmul.f32 %v1474, %v1610
        %v1672 = vmul.f32 %v1476, %v1610
        %v1673 = vmul.f32 %v1478, %v1611
        %v1674 = vmul.f32 %v1480, %v1611
        %v1675 = vmul.f32 %v1482, %v1612
        %v1676 = vmul.f32 %v1484, %v1612
        %v1677 = vld [vmem:[#allocation3] sm:$0xff]
        %v1678 = vld [vmem:[#allocation3 + $0x8] sm:$0xff]
        %v1679 = vld [vmem:[#allocation3 + $0x10] sm:$0xff]
        %v1680 = vld [vmem:[#allocation3 + $0x18] sm:$0xff]
        %v1681 = vld [vmem:[#allocation3 + $0x20] sm:$0xff]
        %v1682 = vld [vmem:[#allocation3 + $0x28] sm:$0xff]
        %v1683 = vld [vmem:[#allocation3 + $0x30] sm:$0xff]
        %v1684 = vld [vmem:[#allocation3 + $0x38] sm:$0xff]
        %v1685 = vld [vmem:[#allocation3 + $0x40] sm:$0xff]
        %v1686 = vld [vmem:[#allocation3 + $0x48] sm:$0xff]
        %v1687 = vld [vmem:[#allocation3 + $0x50] sm:$0xff]
        %v1688 = vld [vmem:[#allocation3 + $0x58] sm:$0xff]
        %v1689 = vld [vmem:[#allocation3 + $0x60] sm:$0xff]
        %v1690 = vld [vmem:[#allocation3 + $0x68] sm:$0xff]
        %v1691 = vld [vmem:[#allocation3 + $0x70] sm:$0xff]
        %v1692 = vld [vmem:[#allocation3 + $0x78] sm:$0xff]
        %v1693 = vld [vmem:[#allocation3 + $0x80] sm:$0xff]
        %v1694 = vld [vmem:[#allocation3 + $0x88] sm:$0xff]
        %v1695 = vld [vmem:[#allocation3 + $0x90] sm:$0xff]
        %v1696 = vld [vmem:[#allocation3 + $0x98] sm:$0xff]
        %v1697 = vld [vmem:[#allocation3 + $0xa0] sm:$0xff]
        %v1698 = vld [vmem:[#allocation3 + $0xa8] sm:$0xff]
        %v1699 = vld [vmem:[#allocation3 + $0xb0] sm:$0xff]
        %v1700 = vld [vmem:[#allocation3 + $0xb8] sm:$0xff]
        %v1701 = vld [vmem:[#allocation3 + $0xc0] sm:$0xff]
        %v1702 = vld [vmem:[#allocation3 + $0xc8] sm:$0xff]
        %v1703 = vld [vmem:[#allocation3 + $0xd0] sm:$0xff]
        %v1704 = vld [vmem:[#allocation3 + $0xd8] sm:$0xff]
        %v1705 = vld [vmem:[#allocation3 + $0xe0] sm:$0xff]
        %v1706 = vld [vmem:[#allocation3 + $0xe8] sm:$0xff]
        %v1707 = vld [vmem:[#allocation3 + $0xf0] sm:$0xff]
        %v1708 = vld [vmem:[#allocation3 + $0xf8] sm:$0xff]
        %v1709 = vpack.c.bf16 %v821, %v817
        %v1710 = vpack.c.bf16 %v823, %v819
        %v1711 = vpack.c.bf16 %v831, %v827
        %v1712 = vpack.c.bf16 %v833, %v829
        %v1713 = vpack.c.bf16 %v841, %v837
        %v1714 = vpack.c.bf16 %v843, %v839
        %v1715 = vpack.c.bf16 %v851, %v847
        %v1716 = vpack.c.bf16 %v853, %v849
        %v1717 = vpack.c.bf16 %v861, %v857
        %v1718 = vpack.c.bf16 %v863, %v859
        %v1719 = vpack.c.bf16 %v871, %v867
        %v1720 = vpack.c.bf16 %v873, %v869
        %v1721 = vpack.c.bf16 %v881, %v877
        %v1722 = vpack.c.bf16 %v883, %v879
        %v1723 = vpack.c.bf16 %v891, %v887
        %v1724 = vpack.c.bf16 %v893, %v889
        %v1725 = vpack.c.bf16 %v1615, %v1613
        %v1726 = vpack.c.bf16 %v1616, %v1614
        %v1727 = vpack.c.bf16 %v1619, %v1617
        %v1728 = vpack.c.bf16 %v1620, %v1618
        %v1729 = vpack.c.bf16 %v1623, %v1621
        %v1730 = vpack.c.bf16 %v1624, %v1622
        %v1731 = vpack.c.bf16 %v1627, %v1625
        %v1732 = vpack.c.bf16 %v1628, %v1626
        %v1733 = vpack.c.bf16 %v1631, %v1629
        %v1734 = vpack.c.bf16 %v1632, %v1630
        %v1735 = vpack.c.bf16 %v1635, %v1633
        %v1736 = vpack.c.bf16 %v1636, %v1634
        %v1737 = vpack.c.bf16 %v1639, %v1637
        %v1738 = vpack.c.bf16 %v1640, %v1638
        %v1739 = vpack.c.bf16 %v1643, %v1641
        %v1740 = vpack.c.bf16 %v1644, %v1642
        %v1741 = vpack.c.bf16 %v1647, %v1645
        %v1742 = vpack.c.bf16 %v1648, %v1646
        %v1743 = vpack.c.bf16 %v1651, %v1649
        %v1744 = vpack.c.bf16 %v1652, %v1650
        %v1745 = vpack.c.bf16 %v1655, %v1653
        %v1746 = vpack.c.bf16 %v1656, %v1654
        %v1747 = vpack.c.bf16 %v1659, %v1657
        %v1748 = vpack.c.bf16 %v1660, %v1658
        %v1749 = vpack.c.bf16 %v1663, %v1661
        %v1750 = vpack.c.bf16 %v1664, %v1662
        %v1751 = vpack.c.bf16 %v1667, %v1665
        %v1752 = vpack.c.bf16 %v1668, %v1666
        %v1753 = vpack.c.bf16 %v1671, %v1669
        %v1754 = vpack.c.bf16 %v1672, %v1670
        %v1755 = vpack.c.bf16 %v1675, %v1673
        %v1756 = vpack.c.bf16 %v1676, %v1674
        %1757 = vmatprep.subr.bf16.mxu0 %v1740
        %1758 = vmatpush1.bf16.msra.mxu0 %v1739
        %1759 = vmatprep.subr.bf16.mxu0 %v1738
        %1760 = vmatpush1.bf16.msra.mxu0 %v1737
        %1761 = vmatprep.subr.bf16.mxu0 %v1736
        %1762 = vmatpush1.bf16.msra.mxu0 %v1735
        %1763 = vmatprep.subr.bf16.mxu0 %v1734
        %1764 = vmatpush1.bf16.msra.mxu0 %v1733
        %1765 = vmatprep.subr.bf16.mxu0 %v1732
        %1766 = vmatpush1.bf16.msra.mxu0 %v1731
        %1767 = vmatprep.subr.bf16.mxu0 %v1730
        %1768 = vmatpush1.bf16.msra.mxu0 %v1729
        %1769 = vmatprep.subr.bf16.mxu0 %v1728
        %1770 = vmatpush1.bf16.msra.mxu0 %v1727
        %1771 = vmatprep.subr.bf16.mxu0 %v1726
        %1772 = vmatpush1.bf16.msra.mxu0 %v1725
        %1773 = vmatprep.subr.bf16.mxu0 %v1756
        %1774 = vmatpush2.bf16.msra.mxu0 %v1755
        %1775 = vmatprep.subr.bf16.mxu0 %v1754
        %1776 = vmatpush2.bf16.msra.mxu0 %v1753
        %1777 = vmatprep.subr.bf16.mxu0 %v1752
        %1778 = vmatpush2.bf16.msra.mxu0 %v1751
        %1779 = vmatprep.subr.bf16.mxu0 %v1750
        %1780 = vmatpush2.bf16.msra.mxu0 %v1749
        %1781 = vmatprep.subr.bf16.mxu0 %v1748
        %1782 = vmatpush2.bf16.msra.mxu0 %v1747
        %1783 = vmatprep.subr.bf16.mxu0 %v1746
        %1784 = vmatpush2.bf16.msra.mxu0 %v1745
        %1785 = vmatprep.subr.bf16.mxu0 %v1744
        %1786 = vmatpush2.bf16.msra.mxu0 %v1743
        %1787 = vmatprep.subr.bf16.mxu0 %v1742
        %1788 = vmatpush2.bf16.msra.mxu0 %v1741
        %1789 = vmatprep.mubr.bf16.mxu0 %v1710
        %1790 = vmatmul.mubr.bf16.gmra.mxu0 %v1709
        %v1791 = vpop.f32.mrf.mxu0
        %v1792 = vadd.f32 0.0, %v1791
        %v1793 = vpop.f32.mrf.mxu0
        %v1794 = vadd.f32 0.0, %v1793
        %v1795 = vpop.f32.mrf.mxu0
        %v1796 = vadd.f32 0.0, %v1795
        %v1797 = vpop.f32.mrf.mxu0
        %v1798 = vadd.f32 0.0, %v1797
        %1799 = vmatprep.mubr.bf16.mxu0 %v1712
        %1800 = vmatmul.mubr.bf16.gmra.mxu0 %v1711
        %v1801 = vpop.f32.mrf.mxu0
        %v1802 = vadd.f32 0.0, %v1801
        %v1803 = vpop.f32.mrf.mxu0
        %v1804 = vadd.f32 0.0, %v1803
        %v1805 = vpop.f32.mrf.mxu0
        %v1806 = vadd.f32 0.0, %v1805
        %v1807 = vpop.f32.mrf.mxu0
        %v1808 = vadd.f32 0.0, %v1807
        %1809 = vmatprep.mubr.bf16.mxu0 %v1714
        %1810 = vmatmul.mubr.bf16.gmra.mxu0 %v1713
        %v1811 = vpop.f32.mrf.mxu0
        %v1812 = vadd.f32 0.0, %v1811
        %v1813 = vpop.f32.mrf.mxu0
        %v1814 = vadd.f32 0.0, %v1813
        %v1815 = vpop.f32.mrf.mxu0
        %v1816 = vadd.f32 0.0, %v1815
        %v1817 = vpop.f32.mrf.mxu0
        %v1818 = vadd.f32 0.0, %v1817
        %1819 = vmatprep.mubr.bf16.mxu0 %v1716
        %1820 = vmatmul.mubr.bf16.gmra.mxu0 %v1715
        %v1821 = vpop.f32.mrf.mxu0
        %v1822 = vadd.f32 0.0, %v1821
        %v1823 = vpop.f32.mrf.mxu0
        %v1824 = vadd.f32 0.0, %v1823
        %v1825 = vpop.f32.mrf.mxu0
        %v1826 = vadd.f32 0.0, %v1825
        %v1827 = vpop.f32.mrf.mxu0
        %v1828 = vadd.f32 0.0, %v1827
        %1829 = vmatprep.mubr.bf16.mxu0 %v1718
        %1830 = vmatmul.mubr.bf16.gmra.mxu0 %v1717
        %v1831 = vpop.f32.mrf.mxu0
        %v1832 = vadd.f32 0.0, %v1831
        %v1833 = vpop.f32.mrf.mxu0
        %v1834 = vadd.f32 0.0, %v1833
        %v1835 = vpop.f32.mrf.mxu0
        %v1836 = vadd.f32 0.0, %v1835
        %v1837 = vpop.f32.mrf.mxu0
        %v1838 = vadd.f32 0.0, %v1837
        %1839 = vmatprep.mubr.bf16.mxu0 %v1720
        %1840 = vmatmul.mubr.bf16.gmra.mxu0 %v1719
        %v1841 = vpop.f32.mrf.mxu0
        %v1842 = vadd.f32 0.0, %v1841
        %v1843 = vpop.f32.mrf.mxu0
        %v1844 = vadd.f32 0.0, %v1843
        %v1845 = vpop.f32.mrf.mxu0
        %v1846 = vadd.f32 0.0, %v1845
        %v1847 = vpop.f32.mrf.mxu0
        %v1848 = vadd.f32 0.0, %v1847
        %1849 = vmatprep.mubr.bf16.mxu0 %v1722
        %1850 = vmatmul.mubr.bf16.gmra.mxu0 %v1721
        %v1851 = vpop.f32.mrf.mxu0
        %v1852 = vadd.f32 0.0, %v1851
        %v1853 = vpop.f32.mrf.mxu0
        %v1854 = vadd.f32 0.0, %v1853
        %v1855 = vpop.f32.mrf.mxu0
        %v1856 = vadd.f32 0.0, %v1855
        %v1857 = vpop.f32.mrf.mxu0
        %v1858 = vadd.f32 0.0, %v1857
        %1859 = vmatprep.mubr.bf16.mxu0 %v1724
        %1860 = vmatmul.mubr.bf16.gmra.mxu0 %v1723
        %v1861 = vpop.f32.mrf.mxu0
        %v1862 = vadd.f32 0.0, %v1861
        %v1863 = vpop.f32.mrf.mxu0
        %v1864 = vadd.f32 0.0, %v1863
        %v1865 = vpop.f32.mrf.mxu0
        %v1866 = vadd.f32 0.0, %v1865
        %v1867 = vpop.f32.mrf.mxu0
        %v1868 = vadd.f32 0.0, %v1867
        %1869 = vdwg.mxu0
        %v1870 = vadd.f32 %v1677, %v1792
        %v1871 = vadd.f32 %v1678, %v1794
        %v1872 = vadd.f32 %v1679, %v1796
        %v1873 = vadd.f32 %v1680, %v1798
        %v1874 = vadd.f32 %v1681, %v1802
        %v1875 = vadd.f32 %v1682, %v1804
        %v1876 = vadd.f32 %v1683, %v1806
        %v1877 = vadd.f32 %v1684, %v1808
        %v1878 = vadd.f32 %v1685, %v1812
        %v1879 = vadd.f32 %v1686, %v1814
        %v1880 = vadd.f32 %v1687, %v1816
        %v1881 = vadd.f32 %v1688, %v1818
        %v1882 = vadd.f32 %v1689, %v1822
        %v1883 = vadd.f32 %v1690, %v1824
        %v1884 = vadd.f32 %v1691, %v1826
        %v1885 = vadd.f32 %v1692, %v1828
        %v1886 = vadd.f32 %v1693, %v1832
        %v1887 = vadd.f32 %v1694, %v1834
        %v1888 = vadd.f32 %v1695, %v1836
        %v1889 = vadd.f32 %v1696, %v1838
        %v1890 = vadd.f32 %v1697, %v1842
        %v1891 = vadd.f32 %v1698, %v1844
        %v1892 = vadd.f32 %v1699, %v1846
        %v1893 = vadd.f32 %v1700, %v1848
        %v1894 = vadd.f32 %v1701, %v1852
        %v1895 = vadd.f32 %v1702, %v1854
        %v1896 = vadd.f32 %v1703, %v1856
        %v1897 = vadd.f32 %v1704, %v1858
        %v1898 = vadd.f32 %v1705, %v1862
        %v1899 = vadd.f32 %v1706, %v1864
        %v1900 = vadd.f32 %v1707, %v1866
        %v1901 = vadd.f32 %v1708, %v1868
        %1902 = vst [vmem:[#allocation3] sm:$0xff] %v1870
        %1903 = vst [vmem:[#allocation3 + $0x8] sm:$0xff] %v1871
        %1904 = vst [vmem:[#allocation3 + $0x10] sm:$0xff] %v1872
        %1905 = vst [vmem:[#allocation3 + $0x18] sm:$0xff] %v1873
        %1906 = vst [vmem:[#allocation3 + $0x20] sm:$0xff] %v1874
        %1907 = vst [vmem:[#allocation3 + $0x28] sm:$0xff] %v1875
        %1908 = vst [vmem:[#allocation3 + $0x30] sm:$0xff] %v1876
        %1909 = vst [vmem:[#allocation3 + $0x38] sm:$0xff] %v1877
        %1910 = vst [vmem:[#allocation3 + $0x40] sm:$0xff] %v1878
        %1911 = vst [vmem:[#allocation3 + $0x48] sm:$0xff] %v1879
        %1912 = vst [vmem:[#allocation3 + $0x50] sm:$0xff] %v1880
        %1913 = vst [vmem:[#allocation3 + $0x58] sm:$0xff] %v1881
        %1914 = vst [vmem:[#allocation3 + $0x60] sm:$0xff] %v1882
        %1915 = vst [vmem:[#allocation3 + $0x68] sm:$0xff] %v1883
        %1916 = vst [vmem:[#allocation3 + $0x70] sm:$0xff] %v1884
        %1917 = vst [vmem:[#allocation3 + $0x78] sm:$0xff] %v1885
        %1918 = vst [vmem:[#allocation3 + $0x80] sm:$0xff] %v1886
        %1919 = vst [vmem:[#allocation3 + $0x88] sm:$0xff] %v1887
        %1920 = vst [vmem:[#allocation3 + $0x90] sm:$0xff] %v1888
        %1921 = vst [vmem:[#allocation3 + $0x98] sm:$0xff] %v1889
        %1922 = vst [vmem:[#allocation3 + $0xa0] sm:$0xff] %v1890
        %1923 = vst [vmem:[#allocation3 + $0xa8] sm:$0xff] %v1891
        %1924 = vst [vmem:[#allocation3 + $0xb0] sm:$0xff] %v1892
        %1925 = vst [vmem:[#allocation3 + $0xb8] sm:$0xff] %v1893
        %1926 = vst [vmem:[#allocation3 + $0xc0] sm:$0xff] %v1894
        %1927 = vst [vmem:[#allocation3 + $0xc8] sm:$0xff] %v1895
        %1928 = vst [vmem:[#allocation3 + $0xd0] sm:$0xff] %v1896
        %1929 = vst [vmem:[#allocation3 + $0xd8] sm:$0xff] %v1897
        %1930 = vst [vmem:[#allocation3 + $0xe0] sm:$0xff] %v1898
        %1931 = vst [vmem:[#allocation3 + $0xe8] sm:$0xff] %v1899
        %1932 = vst [vmem:[#allocation3 + $0xf0] sm:$0xff] %v1900
        %1933 = vst [vmem:[#allocation3 + $0xf8] sm:$0xff] %v1901
        %v1934 = vld [vmem:[#allocation4] sm:$0x3]
        %v1935 = vadd.f32 %v1613, %v1615
        %v1936 = vadd.f32 %v1935, %v1617
        %v1937 = vadd.f32 %v1936, %v1619
        %v1938 = vadd.f32 %v1937, %v1621
        %v1939 = vadd.f32 %v1938, %v1623
        %v1940 = vadd.f32 %v1939, %v1625
        %v1941 = vadd.f32 %v1940, %v1627
        %v1942 = vadd.f32 %v1941, %v1629
        %v1943 = vadd.f32 %v1942, %v1631
        %v1944 = vadd.f32 %v1943, %v1633
        %v1945 = vadd.f32 %v1944, %v1635
        %v1946 = vadd.f32 %v1945, %v1637
        %v1947 = vadd.f32 %v1946, %v1639
        %v1948 = vadd.f32 %v1947, %v1641
        %v1949 = vadd.f32 %v1948, %v1643
        %v1950 = vadd.f32 %v1949, %v1645
        %v1951 = vadd.f32 %v1950, %v1647
        %v1952 = vadd.f32 %v1951, %v1649
        %v1953 = vadd.f32 %v1952, %v1651
        %v1954 = vadd.f32 %v1953, %v1653
        %v1955 = vadd.f32 %v1954, %v1655
        %v1956 = vadd.f32 %v1955, %v1657
        %v1957 = vadd.f32 %v1956, %v1659
        %v1958 = vadd.f32 %v1957, %v1661
        %v1959 = vadd.f32 %v1958, %v1663
        %v1960 = vadd.f32 %v1959, %v1665
        %v1961 = vadd.f32 %v1960, %v1667
        %v1962 = vadd.f32 %v1961, %v1669
        %v1963 = vadd.f32 %v1962, %v1671
        %v1964 = vadd.f32 %v1963, %v1673
        %v1965 = vadd.f32 %v1964, %v1675
        %v1966 = vrot.slane %v1965, 4
        %v1967 = vadd.f32 %v1965, %v1966
        %v1968 = vrot.slane %v1967, 2
        %v1969 = vadd.f32 %v1967, %v1968
        %v1970 = vrot.slane %v1969, 1
        %v1971 = vadd.f32 %v1969, %v1970
        %v1972 = vadd.f32 %v1614, %v1616
        %v1973 = vadd.f32 %v1972, %v1618
        %v1974 = vadd.f32 %v1973, %v1620
        %v1975 = vadd.f32 %v1974, %v1622
        %v1976 = vadd.f32 %v1975, %v1624
        %v1977 = vadd.f32 %v1976, %v1626
        %v1978 = vadd.f32 %v1977, %v1628
        %v1979 = vadd.f32 %v1978, %v1630
        %v1980 = vadd.f32 %v1979, %v1632
        %v1981 = vadd.f32 %v1980, %v1634
        %v1982 = vadd.f32 %v1981, %v1636
        %v1983 = vadd.f32 %v1982, %v1638
        %v1984 = vadd.f32 %v1983, %v1640
        %v1985 = vadd.f32 %v1984, %v1642
        %v1986 = vadd.f32 %v1985, %v1644
        %v1987 = vadd.f32 %v1986, %v1646
        %v1988 = vadd.f32 %v1987, %v1648
        %v1989 = vadd.f32 %v1988, %v1650
        %v1990 = vadd.f32 %v1989, %v1652
        %v1991 = vadd.f32 %v1990, %v1654
        %v1992 = vadd.f32 %v1991, %v1656
        %v1993 = vadd.f32 %v1992, %v1658
        %v1994 = vadd.f32 %v1993, %v1660
        %v1995 = vadd.f32 %v1994, %v1662
        %v1996 = vadd.f32 %v1995, %v1664
        %v1997 = vadd.f32 %v1996, %v1666
        %v1998 = vadd.f32 %v1997, %v1668
        %v1999 = vadd.f32 %v1998, %v1670
        %v2000 = vadd.f32 %v1999, %v1672
        %v2001 = vadd.f32 %v2000, %v1674
        %v2002 = vadd.f32 %v2001, %v1676
        %v2003 = vrot.slane %v2002, 4
        %v2004 = vadd.f32 %v2002, %v2003
        %v2005 = vrot.slane %v2004, 2
        %v2006 = vadd.f32 %v2004, %v2005
        %v2007 = vrot.slane %v2006, 1
        %v2008 = vadd.f32 %v2006, %v2007
        %v2011 = vcombine.low %v1971, %v2008
        %v2013 = vunpack.c.l.s4 1966171168
        %v2014 = vunpack.c.0.s8 %v2013
        %v2015 = vlaneseq
        %v2016 = vshrl.u32 %v2015, 7
        %v2017 = vsub.s32 %v2014, %v2016
        %v2018 = vrot.slane %v2011, %v2017
        %v2020 = vunpack.c.l.s4 1966171168
        %v2021 = vunpack.c.0.s8 %v2020
        %v2022 = vlaneseq
        %v2023 = vshrl.u32 %v2022, 7
        %v2024 = vsub.s32 %v2021, %v2023
        %v2025 = vrot.slane %v2018, %v2024
        %v2027 = vadd.f32 %v1934, %v2025
        %v2028 = vlaneseq
        %vm2029 = vcmp.ge.s32.totalorder %v2028, 0
        %vm2030 = vcmp.lt.s32.totalorder %v2028, 256
        %vm2031 = vmand %vm2029, %vm2030
        %2032 = vst.msk [vmem:[#allocation4] sm:$0x3] %vm2031, %v2027
        // Predicated region
        $region53: #{oa_forward.1} parent=47 // pred_check
          %p2033 = pneg %p290
        $region54: #{oa_forward.1} parent=47 // pred_check_branch
          %2035 = sbr.rel (%p2033) target = $region56
        $region55: #{oa_forward.1} parent=47 // pred_region
          %v2036 = vld [vmem:[%s288] sm:$0xff]
          %v2037 = vld [vmem:[%s288 + $0x8] sm:$0xff]
          %v2038 = vld [vmem:[%s288 + $0x10] sm:$0xff]
          %v2039 = vld [vmem:[%s288 + $0x18] sm:$0xff]
          %v2040 = vld [vmem:[%s288 + $0x20] sm:$0xff]
          %v2041 = vld [vmem:[%s288 + $0x28] sm:$0xff]
          %v2042 = vld [vmem:[%s288 + $0x30] sm:$0xff]
          %v2043 = vld [vmem:[%s288 + $0x38] sm:$0xff]
          %v2044 = vld [vmem:[%s288 + $0x40] sm:$0xff]
          %v2045 = vld [vmem:[%s288 + $0x48] sm:$0xff]
          %v2046 = vld [vmem:[%s288 + $0x50] sm:$0xff]
          %v2047 = vld [vmem:[%s288 + $0x58] sm:$0xff]
          %v2048 = vld [vmem:[%s288 + $0x60] sm:$0xff]
          %v2049 = vld [vmem:[%s288 + $0x68] sm:$0xff]
          %v2050 = vld [vmem:[%s288 + $0x70] sm:$0xff]
          %v2051 = vld [vmem:[%s288 + $0x78] sm:$0xff]
          %v2052 = vld [vmem:[%s288 + $0x80] sm:$0xff]
          %v2053 = vld [vmem:[%s288 + $0x88] sm:$0xff]
          %v2054 = vld [vmem:[%s288 + $0x90] sm:$0xff]
          %v2055 = vld [vmem:[%s288 + $0x98] sm:$0xff]
          %v2056 = vld [vmem:[%s288 + $0xa0] sm:$0xff]
          %v2057 = vld [vmem:[%s288 + $0xa8] sm:$0xff]
          %v2058 = vld [vmem:[%s288 + $0xb0] sm:$0xff]
          %v2059 = vld [vmem:[%s288 + $0xb8] sm:$0xff]
          %v2060 = vld [vmem:[%s288 + $0xc0] sm:$0xff]
          %v2061 = vld [vmem:[%s288 + $0xc8] sm:$0xff]
          %v2062 = vld [vmem:[%s288 + $0xd0] sm:$0xff]
          %v2063 = vld [vmem:[%s288 + $0xd8] sm:$0xff]
          %v2064 = vld [vmem:[%s288 + $0xe0] sm:$0xff]
          %v2065 = vld [vmem:[%s288 + $0xe8] sm:$0xff]
          %v2066 = vld [vmem:[%s288 + $0xf0] sm:$0xff]
          %v2067 = vld [vmem:[%s288 + $0xf8] sm:$0xff]
          %v2068 = vld [vmem:[#allocation3] sm:$0xff]
          %v2069 = vld [vmem:[#allocation3 + $0x8] sm:$0xff]
          %v2070 = vld [vmem:[#allocation3 + $0x10] sm:$0xff]
          %v2071 = vld [vmem:[#allocation3 + $0x18] sm:$0xff]
          %v2072 = vld [vmem:[#allocation3 + $0x20] sm:$0xff]
          %v2073 = vld [vmem:[#allocation3 + $0x28] sm:$0xff]
          %v2074 = vld [vmem:[#allocation3 + $0x30] sm:$0xff]
          %v2075 = vld [vmem:[#allocation3 + $0x38] sm:$0xff]
          %v2076 = vld [vmem:[#allocation3 + $0x40] sm:$0xff]
          %v2077 = vld [vmem:[#allocation3 + $0x48] sm:$0xff]
          %v2078 = vld [vmem:[#allocation3 + $0x50] sm:$0xff]
          %v2079 = vld [vmem:[#allocation3 + $0x58] sm:$0xff]
          %v2080 = vld [vmem:[#allocation3 + $0x60] sm:$0xff]
          %v2081 = vld [vmem:[#allocation3 + $0x68] sm:$0xff]
          %v2082 = vld [vmem:[#allocation3 + $0x70] sm:$0xff]
          %v2083 = vld [vmem:[#allocation3 + $0x78] sm:$0xff]
          %v2084 = vld [vmem:[#allocation3 + $0x80] sm:$0xff]
          %v2085 = vld [vmem:[#allocation3 + $0x88] sm:$0xff]
          %v2086 = vld [vmem:[#allocation3 + $0x90] sm:$0xff]
          %v2087 = vld [vmem:[#allocation3 + $0x98] sm:$0xff]
          %v2088 = vld [vmem:[#allocation3 + $0xa0] sm:$0xff]
          %v2089 = vld [vmem:[#allocation3 + $0xa8] sm:$0xff]
          %v2090 = vld [vmem:[#allocation3 + $0xb0] sm:$0xff]
          %v2091 = vld [vmem:[#allocation3 + $0xb8] sm:$0xff]
          %v2092 = vld [vmem:[#allocation3 + $0xc0] sm:$0xff]
          %v2093 = vld [vmem:[#allocation3 + $0xc8] sm:$0xff]
          %v2094 = vld [vmem:[#allocation3 + $0xd0] sm:$0xff]
          %v2095 = vld [vmem:[#allocation3 + $0xd8] sm:$0xff]
          %v2096 = vld [vmem:[#allocation3 + $0xe0] sm:$0xff]
          %v2097 = vld [vmem:[#allocation3 + $0xe8] sm:$0xff]
          %v2098 = vld [vmem:[#allocation3 + $0xf0] sm:$0xff]
          %v2099 = vld [vmem:[#allocation3 + $0xf8] sm:$0xff]
          %v2100 = vld [vmem:[#allocation4] sm:$0x3]
          %v2101 = vadd.f32 %v2100, 1e-09
          %v2102 = vrcp.pop %v2101
          %v2103 = vmul.f32 1.0, %v2102
          %v2105 = vlaneseq
          %v2106 = vshrl.u32 %v2105, 7
          %v2107 = vsub.s32 0, %v2106
          %v2108 = vrot.slane %v2103, %v2107
          %v2109 = vlaneseq
          %v2110 = vshrl.u32 %v2109, 7
          %v2111 = vsub.s32 1, %v2110
          %v2112 = vrot.slane %v2103, %v2111
          %v2115 = vmul.f32 %v2068, %v2108
          %v2116 = vmul.f32 %v2069, %v2112
          %v2117 = vmul.f32 %v2070, %v2108
          %v2118 = vmul.f32 %v2071, %v2112
          %v2119 = vmul.f32 %v2072, %v2108
          %v2120 = vmul.f32 %v2073, %v2112
          %v2121 = vmul.f32 %v2074, %v2108
          %v2122 = vmul.f32 %v2075, %v2112
          %v2123 = vmul.f32 %v2076, %v2108
          %v2124 = vmul.f32 %v2077, %v2112
          %v2125 = vmul.f32 %v2078, %v2108
          %v2126 = vmul.f32 %v2079, %v2112
          %v2127 = vmul.f32 %v2080, %v2108
          %v2128 = vmul.f32 %v2081, %v2112
          %v2129 = vmul.f32 %v2082, %v2108
          %v2130 = vmul.f32 %v2083, %v2112
          %v2131 = vmul.f32 %v2084, %v2108
          %v2132 = vmul.f32 %v2085, %v2112
          %v2133 = vmul.f32 %v2086, %v2108
          %v2134 = vmul.f32 %v2087, %v2112
          %v2135 = vmul.f32 %v2088, %v2108
          %v2136 = vmul.f32 %v2089, %v2112
          %v2137 = vmul.f32 %v2090, %v2108
          %v2138 = vmul.f32 %v2091, %v2112
          %v2139 = vmul.f32 %v2092, %v2108
          %v2140 = vmul.f32 %v2093, %v2112
          %v2141 = vmul.f32 %v2094, %v2108
          %v2142 = vmul.f32 %v2095, %v2112
          %v2143 = vmul.f32 %v2096, %v2108
          %v2144 = vmul.f32 %v2097, %v2112
          %v2145 = vmul.f32 %v2098, %v2108
          %v2146 = vmul.f32 %v2099, %v2112
          %v2147 = vsub.f32 %v2036, %v2115
          %v2148 = vsub.f32 %v2037, %v2116
          %v2149 = vsub.f32 %v2038, %v2117
          %v2150 = vsub.f32 %v2039, %v2118
          %v2151 = vsub.f32 %v2040, %v2119
          %v2152 = vsub.f32 %v2041, %v2120
          %v2153 = vsub.f32 %v2042, %v2121
          %v2154 = vsub.f32 %v2043, %v2122
          %v2155 = vsub.f32 %v2044, %v2123
          %v2156 = vsub.f32 %v2045, %v2124
          %v2157 = vsub.f32 %v2046, %v2125
          %v2158 = vsub.f32 %v2047, %v2126
          %v2159 = vsub.f32 %v2048, %v2127
          %v2160 = vsub.f32 %v2049, %v2128
          %v2161 = vsub.f32 %v2050, %v2129
          %v2162 = vsub.f32 %v2051, %v2130
          %v2163 = vsub.f32 %v2052, %v2131
          %v2164 = vsub.f32 %v2053, %v2132
          %v2165 = vsub.f32 %v2054, %v2133
          %v2166 = vsub.f32 %v2055, %v2134
          %v2167 = vsub.f32 %v2056, %v2135
          %v2168 = vsub.f32 %v2057, %v2136
          %v2169 = vsub.f32 %v2058, %v2137
          %v2170 = vsub.f32 %v2059, %v2138
          %v2171 = vsub.f32 %v2060, %v2139
          %v2172 = vsub.f32 %v2061, %v2140
          %v2173 = vsub.f32 %v2062, %v2141
          %v2174 = vsub.f32 %v2063, %v2142
          %v2175 = vsub.f32 %v2064, %v2143
          %v2176 = vsub.f32 %v2065, %v2144
          %v2177 = vsub.f32 %v2066, %v2145
          %v2178 = vsub.f32 %v2067, %v2146
          %v2179 = vpack.c.bf16 %v2149, %v2147
          %v2180 = vpack.c.bf16 %v2150, %v2148
          %v2181 = vpack.c.bf16 %v2153, %v2151
          %v2182 = vpack.c.bf16 %v2154, %v2152
          %v2183 = vpack.c.bf16 %v2157, %v2155
          %v2184 = vpack.c.bf16 %v2158, %v2156
          %v2185 = vpack.c.bf16 %v2161, %v2159
          %v2186 = vpack.c.bf16 %v2162, %v2160
          %v2187 = vpack.c.bf16 %v2165, %v2163
          %v2188 = vpack.c.bf16 %v2166, %v2164
          %v2189 = vpack.c.bf16 %v2169, %v2167
          %v2190 = vpack.c.bf16 %v2170, %v2168
          %v2191 = vpack.c.bf16 %v2173, %v2171
          %v2192 = vpack.c.bf16 %v2174, %v2172
          %v2193 = vpack.c.bf16 %v2177, %v2175
          %v2194 = vpack.c.bf16 %v2178, %v2176
          %v2195 = vld [vmem:[%s5] sm:$0xf]
          %v2196 = vld [vmem:[%s5 + $0x4] sm:$0xf]
          %v2197 = vld [vmem:[%s5 + $0x8] sm:$0xf]
          %v2198 = vld [vmem:[%s5 + $0xc] sm:$0xf]
          %v2199 = vld [vmem:[%s5 + $0x10] sm:$0xf]
          %v2200 = vld [vmem:[%s5 + $0x14] sm:$0xf]
          %v2201 = vld [vmem:[%s5 + $0x18] sm:$0xf]
          %v2202 = vld [vmem:[%s5 + $0x1c] sm:$0xf]
          %v2203 = vld [vmem:[%s5 + $0x20] sm:$0xf]
          %v2204 = vld [vmem:[%s5 + $0x24] sm:$0xf]
          %v2205 = vld [vmem:[%s5 + $0x28] sm:$0xf]
          %v2206 = vld [vmem:[%s5 + $0x2c] sm:$0xf]
          %v2207 = vld [vmem:[%s5 + $0x30] sm:$0xf]
          %v2208 = vld [vmem:[%s5 + $0x34] sm:$0xf]
          %v2209 = vld [vmem:[%s5 + $0x38] sm:$0xf]
          %v2210 = vld [vmem:[%s5 + $0x3c] sm:$0xf]
          %v2211 = vld [vmem:[%s6] sm:$0xff]
          %v2212 = vld [vmem:[%s6 + $0x8] sm:$0xff]
          %v2213 = vld [vmem:[%s6 + $0x10] sm:$0xff]
          %v2214 = vld [vmem:[%s6 + $0x18] sm:$0xff]
          %v2215 = vld [vmem:[%s6 + $0x20] sm:$0xff]
          %v2216 = vld [vmem:[%s6 + $0x28] sm:$0xff]
          %v2217 = vld [vmem:[%s6 + $0x30] sm:$0xff]
          %v2218 = vld [vmem:[%s6 + $0x38] sm:$0xff]
          %v2219 = vld [vmem:[%s6 + $0x40] sm:$0xff]
          %v2220 = vld [vmem:[%s6 + $0x48] sm:$0xff]
          %v2221 = vld [vmem:[%s6 + $0x50] sm:$0xff]
          %v2222 = vld [vmem:[%s6 + $0x58] sm:$0xff]
          %v2223 = vld [vmem:[%s6 + $0x60] sm:$0xff]
          %v2224 = vld [vmem:[%s6 + $0x68] sm:$0xff]
          %v2225 = vld [vmem:[%s6 + $0x70] sm:$0xff]
          %v2226 = vld [vmem:[%s6 + $0x78] sm:$0xff]
          %2228 = vset.pattern.permute.xlu0 0
          %2229 = vperm.xlu0 %2228, %v2211
          %v2230 = vpop.permute.xlu0 %2229
          %2233 = vset.pattern.permute.xlu0 0
          %2234 = vperm.xlu0 %2233, %v2212
          %v2235 = vpop.permute.xlu0 %2234
          %2238 = vset.pattern.permute.xlu0 0
          %2239 = vperm.xlu0 %2238, %v2213
          %v2240 = vpop.permute.xlu0 %2239
          %2243 = vset.pattern.permute.xlu0 0
          %2244 = vperm.xlu0 %2243, %v2214
          %v2245 = vpop.permute.xlu0 %2244
          %2248 = vset.pattern.permute.xlu0 0
          %2249 = vperm.xlu0 %2248, %v2215
          %v2250 = vpop.permute.xlu0 %2249
          %2253 = vset.pattern.permute.xlu0 0
          %2254 = vperm.xlu0 %2253, %v2216
          %v2255 = vpop.permute.xlu0 %2254
          %2258 = vset.pattern.permute.xlu0 0
          %2259 = vperm.xlu0 %2258, %v2217
          %v2260 = vpop.permute.xlu0 %2259
          %2263 = vset.pattern.permute.xlu0 0
          %2264 = vperm.xlu0 %2263, %v2218
          %v2265 = vpop.permute.xlu0 %2264
          %2268 = vset.pattern.permute.xlu0 0
          %2269 = vperm.xlu0 %2268, %v2219
          %v2270 = vpop.permute.xlu0 %2269
          %2273 = vset.pattern.permute.xlu0 0
          %2274 = vperm.xlu0 %2273, %v2220
          %v2275 = vpop.permute.xlu0 %2274
          %2278 = vset.pattern.permute.xlu0 0
          %2279 = vperm.xlu0 %2278, %v2221
          %v2280 = vpop.permute.xlu0 %2279
          %2283 = vset.pattern.permute.xlu0 0
          %2284 = vperm.xlu0 %2283, %v2222
          %v2285 = vpop.permute.xlu0 %2284
          %2288 = vset.pattern.permute.xlu0 0
          %2289 = vperm.xlu0 %2288, %v2223
          %v2290 = vpop.permute.xlu0 %2289
          %2293 = vset.pattern.permute.xlu0 0
          %2294 = vperm.xlu0 %2293, %v2224
          %v2295 = vpop.permute.xlu0 %2294
          %2298 = vset.pattern.permute.xlu0 0
          %2299 = vperm.xlu0 %2298, %v2225
          %v2300 = vpop.permute.xlu0 %2299
          %2303 = vset.pattern.permute.xlu0 0
          %2304 = vperm.xlu0 %2303, %v2226
          %v2305 = vpop.permute.xlu0 %2304
          %v2323 = vunpack.c.l.b16 %v2195
          %v2324 = vunpack.c.l.b16 %v2196
          %v2325 = vunpack.c.l.b16 %v2197
          %v2326 = vunpack.c.l.b16 %v2198
          %v2327 = vunpack.c.l.b16 %v2199
          %v2328 = vunpack.c.l.b16 %v2200
          %v2329 = vunpack.c.l.b16 %v2201
          %v2330 = vunpack.c.l.b16 %v2202
          %v2331 = vunpack.c.l.b16 %v2203
          %v2332 = vunpack.c.l.b16 %v2204
          %v2333 = vunpack.c.l.b16 %v2205
          %v2334 = vunpack.c.l.b16 %v2206
          %v2335 = vunpack.c.l.b16 %v2207
          %v2336 = vunpack.c.l.b16 %v2208
          %v2337 = vunpack.c.l.b16 %v2209
          %v2338 = vunpack.c.l.b16 %v2210
          %v2339 = vpack.c.b16 %v2324, %v2323
          %v2340 = vpack.c.b16 %v2326, %v2325
          %v2341 = vpack.c.b16 %v2328, %v2327
          %v2342 = vpack.c.b16 %v2330, %v2329
          %v2343 = vpack.c.b16 %v2332, %v2331
          %v2344 = vpack.c.b16 %v2334, %v2333
          %v2345 = vpack.c.b16 %v2336, %v2335
          %v2346 = vpack.c.b16 %v2338, %v2337
          %2355 = vmatprep.subr.bf16.mxu0 %v2194
          %2356 = vmatpush1.bf16.msra.mxu0 %v2193
          %2357 = vmatprep.subr.bf16.mxu0 %v2192
          %2358 = vmatpush1.bf16.msra.mxu0 %v2191
          %2359 = vmatprep.subr.bf16.mxu0 %v2190
          %2360 = vmatpush1.bf16.msra.mxu0 %v2189
          %2361 = vmatprep.subr.bf16.mxu0 %v2188
          %2362 = vmatpush1.bf16.msra.mxu0 %v2187
          %2363 = vmatprep.subr.bf16.mxu0 %v2186
          %2364 = vmatpush1.bf16.msra.mxu0 %v2185
          %2365 = vmatprep.subr.bf16.mxu0 %v2184
          %2366 = vmatpush1.bf16.msra.mxu0 %v2183
          %2367 = vmatprep.subr.bf16.mxu0 %v2182
          %2368 = vmatpush1.bf16.msra.mxu0 %v2181
          %2369 = vmatprep.subr.bf16.mxu0 %v2180
          %2370 = vmatpush1.bf16.msra.mxu0 %v2179
          %2371 = vmatprep.subr.bf16.mxu0 0
          %2372 = vmatpush2.bf16.msra.mxu0 0
          %2373 = vmatprep.subr.bf16.mxu0 0
          %2374 = vmatpush2.bf16.msra.mxu0 0
          %2375 = vmatprep.subr.bf16.mxu0 0
          %2376 = vmatpush2.bf16.msra.mxu0 0
          %2377 = vmatprep.subr.bf16.mxu0 0
          %2378 = vmatpush2.bf16.msra.mxu0 0
          %2379 = vmatprep.subr.bf16.mxu0 0
          %2380 = vmatpush2.bf16.msra.mxu0 0
          %2381 = vmatprep.subr.bf16.mxu0 0
          %2382 = vmatpush2.bf16.msra.mxu0 0
          %2383 = vmatprep.subr.bf16.mxu0 0
          %2384 = vmatpush2.bf16.msra.mxu0 0
          %2385 = vmatprep.subr.bf16.mxu0 0
          %2386 = vmatpush2.bf16.msra.mxu0 0
          %2387 = vmatprep.mubr.bf16.mxu0 0
          %2388 = vmatmul.mubr.bf16.gmra.mxu0 %v2339
          %v2389 = vpop.f32.mrf.mxu0
          %v2390 = vadd.f32 %v2230, %v2389
          %v2391 = vpop.f32.mrf.mxu0
          %v2392 = vadd.f32 %v2230, %v2391
          %v2393 = vpop.f32.mrf.mxu0
          %v2394 = vadd.f32 %v2235, %v2393
          %v2395 = vpop.f32.mrf.mxu0
          %v2396 = vadd.f32 %v2235, %v2395
          %2397 = vmatprep.mubr.bf16.mxu0 0
          %2398 = vmatmul.mubr.bf16.gmra.mxu0 %v2340
          %v2399 = vpop.f32.mrf.mxu0
          %v2400 = vadd.f32 %v2240, %v2399
          %v2401 = vpop.f32.mrf.mxu0
          %v2402 = vadd.f32 %v2240, %v2401
          %v2403 = vpop.f32.mrf.mxu0
          %v2404 = vadd.f32 %v2245, %v2403
          %v2405 = vpop.f32.mrf.mxu0
          %v2406 = vadd.f32 %v2245, %v2405
          %2407 = vmatprep.mubr.bf16.mxu0 0
          %2408 = vmatmul.mubr.bf16.gmra.mxu0 %v2341
          %v2409 = vpop.f32.mrf.mxu0
          %v2410 = vadd.f32 %v2250, %v2409
          %v2411 = vpop.f32.mrf.mxu0
          %v2412 = vadd.f32 %v2250, %v2411
          %v2413 = vpop.f32.mrf.mxu0
          %v2414 = vadd.f32 %v2255, %v2413
          %v2415 = vpop.f32.mrf.mxu0
          %v2416 = vadd.f32 %v2255, %v2415
          %2417 = vmatprep.mubr.bf16.mxu0 0
          %2418 = vmatmul.mubr.bf16.gmra.mxu0 %v2342
          %v2419 = vpop.f32.mrf.mxu0
          %v2420 = vadd.f32 %v2260, %v2419
          %v2421 = vpop.f32.mrf.mxu0
          %v2422 = vadd.f32 %v2260, %v2421
          %v2423 = vpop.f32.mrf.mxu0
          %v2424 = vadd.f32 %v2265, %v2423
          %v2425 = vpop.f32.mrf.mxu0
          %v2426 = vadd.f32 %v2265, %v2425
          %2427 = vmatprep.mubr.bf16.mxu0 0
          %2428 = vmatmul.mubr.bf16.gmra.mxu0 %v2343
          %v2429 = vpop.f32.mrf.mxu0
          %v2430 = vadd.f32 %v2270, %v2429
          %v2431 = vpop.f32.mrf.mxu0
          %v2432 = vadd.f32 %v2270, %v2431
          %v2433 = vpop.f32.mrf.mxu0
          %v2434 = vadd.f32 %v2275, %v2433
          %v2435 = vpop.f32.mrf.mxu0
          %v2436 = vadd.f32 %v2275, %v2435
          %2437 = vmatprep.mubr.bf16.mxu0 0
          %2438 = vmatmul.mubr.bf16.gmra.mxu0 %v2344
          %v2439 = vpop.f32.mrf.mxu0
          %v2440 = vadd.f32 %v2280, %v2439
          %v2441 = vpop.f32.mrf.mxu0
          %v2442 = vadd.f32 %v2280, %v2441
          %v2443 = vpop.f32.mrf.mxu0
          %v2444 = vadd.f32 %v2285, %v2443
          %v2445 = vpop.f32.mrf.mxu0
          %v2446 = vadd.f32 %v2285, %v2445
          %2447 = vmatprep.mubr.bf16.mxu0 0
          %2448 = vmatmul.mubr.bf16.gmra.mxu0 %v2345
          %v2449 = vpop.f32.mrf.mxu0
          %v2450 = vadd.f32 %v2290, %v2449
          %v2451 = vpop.f32.mrf.mxu0
          %v2452 = vadd.f32 %v2290, %v2451
          %v2453 = vpop.f32.mrf.mxu0
          %v2454 = vadd.f32 %v2295, %v2453
          %v2455 = vpop.f32.mrf.mxu0
          %v2456 = vadd.f32 %v2295, %v2455
          %2457 = vmatprep.mubr.bf16.mxu0 0
          %2458 = vmatmul.mubr.bf16.gmra.mxu0 %v2346
          %v2459 = vpop.f32.mrf.mxu0
          %v2460 = vadd.f32 %v2300, %v2459
          %v2461 = vpop.f32.mrf.mxu0
          %v2462 = vadd.f32 %v2300, %v2461
          %v2463 = vpop.f32.mrf.mxu0
          %v2464 = vadd.f32 %v2305, %v2463
          %v2465 = vpop.f32.mrf.mxu0
          %v2466 = vadd.f32 %v2305, %v2465
          %2467 = vdwg.mxu0
          %v2468 = vmax.f32 %v2390, 0.0
          %v2469 = vmax.f32 %v2392, 0.0
          %v2470 = vmax.f32 %v2394, 0.0
          %v2471 = vmax.f32 %v2396, 0.0
          %v2472 = vmax.f32 %v2400, 0.0
          %v2473 = vmax.f32 %v2402, 0.0
          %v2474 = vmax.f32 %v2404, 0.0
          %v2475 = vmax.f32 %v2406, 0.0
          %v2476 = vmax.f32 %v2410, 0.0
          %v2477 = vmax.f32 %v2412, 0.0
          %v2478 = vmax.f32 %v2414, 0.0
          %v2479 = vmax.f32 %v2416, 0.0
          %v2480 = vmax.f32 %v2420, 0.0
          %v2481 = vmax.f32 %v2422, 0.0
          %v2482 = vmax.f32 %v2424, 0.0
          %v2483 = vmax.f32 %v2426, 0.0
          %v2484 = vmax.f32 %v2430, 0.0
          %v2485 = vmax.f32 %v2432, 0.0
          %v2486 = vmax.f32 %v2434, 0.0
          %v2487 = vmax.f32 %v2436, 0.0
          %v2488 = vmax.f32 %v2440, 0.0
          %v2489 = vmax.f32 %v2442, 0.0
          %v2490 = vmax.f32 %v2444, 0.0
          %v2491 = vmax.f32 %v2446, 0.0
          %v2492 = vmax.f32 %v2450, 0.0
          %v2493 = vmax.f32 %v2452, 0.0
          %v2494 = vmax.f32 %v2454, 0.0
          %v2495 = vmax.f32 %v2456, 0.0
          %v2496 = vmax.f32 %v2460, 0.0
          %v2497 = vmax.f32 %v2462, 0.0
          %v2498 = vmax.f32 %v2464, 0.0
          %v2499 = vmax.f32 %v2466, 0.0
          %v2500 = vadd.f32 %v2036, %v2468
          %v2501 = vadd.f32 %v2037, %v2469
          %v2502 = vadd.f32 %v2038, %v2470
          %v2503 = vadd.f32 %v2039, %v2471
          %v2504 = vadd.f32 %v2040, %v2472
          %v2505 = vadd.f32 %v2041, %v2473
          %v2506 = vadd.f32 %v2042, %v2474
          %v2507 = vadd.f32 %v2043, %v2475
          %v2508 = vadd.f32 %v2044, %v2476
          %v2509 = vadd.f32 %v2045, %v2477
          %v2510 = vadd.f32 %v2046, %v2478
          %v2511 = vadd.f32 %v2047, %v2479
          %v2512 = vadd.f32 %v2048, %v2480
          %v2513 = vadd.f32 %v2049, %v2481
          %v2514 = vadd.f32 %v2050, %v2482
          %v2515 = vadd.f32 %v2051, %v2483
          %v2516 = vadd.f32 %v2052, %v2484
          %v2517 = vadd.f32 %v2053, %v2485
          %v2518 = vadd.f32 %v2054, %v2486
          %v2519 = vadd.f32 %v2055, %v2487
          %v2520 = vadd.f32 %v2056, %v2488
          %v2521 = vadd.f32 %v2057, %v2489
          %v2522 = vadd.f32 %v2058, %v2490
          %v2523 = vadd.f32 %v2059, %v2491
          %v2524 = vadd.f32 %v2060, %v2492
          %v2525 = vadd.f32 %v2061, %v2493
          %v2526 = vadd.f32 %v2062, %v2494
          %v2527 = vadd.f32 %v2063, %v2495
          %v2528 = vadd.f32 %v2064, %v2496
          %v2529 = vadd.f32 %v2065, %v2497
          %v2530 = vadd.f32 %v2066, %v2498
          %v2531 = vadd.f32 %v2067, %v2499
          %2532 = vst [vmem:[%s283] sm:$0xff] %v2500
          %2533 = vst [vmem:[%s283 + $0x8] sm:$0xff] %v2501
          %2534 = vst [vmem:[%s283 + $0x10] sm:$0xff] %v2502
          %2535 = vst [vmem:[%s283 + $0x18] sm:$0xff] %v2503
          %2536 = vst [vmem:[%s283 + $0x20] sm:$0xff] %v2504
          %2537 = vst [vmem:[%s283 + $0x28] sm:$0xff] %v2505
          %2538 = vst [vmem:[%s283 + $0x30] sm:$0xff] %v2506
          %2539 = vst [vmem:[%s283 + $0x38] sm:$0xff] %v2507
          %2540 = vst [vmem:[%s283 + $0x40] sm:$0xff] %v2508
          %2541 = vst [vmem:[%s283 + $0x48] sm:$0xff] %v2509
          %2542 = vst [vmem:[%s283 + $0x50] sm:$0xff] %v2510
          %2543 = vst [vmem:[%s283 + $0x58] sm:$0xff] %v2511
          %2544 = vst [vmem:[%s283 + $0x60] sm:$0xff] %v2512
          %2545 = vst [vmem:[%s283 + $0x68] sm:$0xff] %v2513
          %2546 = vst [vmem:[%s283 + $0x70] sm:$0xff] %v2514
          %2547 = vst [vmem:[%s283 + $0x78] sm:$0xff] %v2515
          %2548 = vst [vmem:[%s283 + $0x80] sm:$0xff] %v2516
          %2549 = vst [vmem:[%s283 + $0x88] sm:$0xff] %v2517
          %2550 = vst [vmem:[%s283 + $0x90] sm:$0xff] %v2518
          %2551 = vst [vmem:[%s283 + $0x98] sm:$0xff] %v2519
          %2552 = vst [vmem:[%s283 + $0xa0] sm:$0xff] %v2520
          %2553 = vst [vmem:[%s283 + $0xa8] sm:$0xff] %v2521
          %2554 = vst [vmem:[%s283 + $0xb0] sm:$0xff] %v2522
          %2555 = vst [vmem:[%s283 + $0xb8] sm:$0xff] %v2523
          %2556 = vst [vmem:[%s283 + $0xc0] sm:$0xff] %v2524
          %2557 = vst [vmem:[%s283 + $0xc8] sm:$0xff] %v2525
          %2558 = vst [vmem:[%s283 + $0xd0] sm:$0xff] %v2526
          %2559 = vst [vmem:[%s283 + $0xd8] sm:$0xff] %v2527
          %2560 = vst [vmem:[%s283 + $0xe0] sm:$0xff] %v2528
          %2561 = vst [vmem:[%s283 + $0xe8] sm:$0xff] %v2529
          %2562 = vst [vmem:[%s283 + $0xf0] sm:$0xff] %v2530
          %2563 = vst [vmem:[%s283 + $0xf8] sm:$0xff] %v2531
        $region56: #{oa_forward.1} parent=47 // pred_fallthru
          _
        %s2564 = sand.u32 %s193, 1
        %s2565 = scalar_lea.sflag [#allocation6], %s2564
        %s2566 = sand.u32 %s193, 1
        %s2567 = smul.addr %s2566, 256
        %s2568 = scalar_lea.vmem [#allocation5], %s2567
        // Predicated region
        $region57: #{oa_forward.1} parent=47 // pred_check
          %p2569 = pneg %p203
        $region58: #{oa_forward.1} parent=47 // pred_check_branch
          %2571 = sbr.rel (%p2569) target = $region60
        $region59: #{oa_forward.1} parent=47 // pred_region
          %s2573 = ssub.s32 4096, 4096
          %2574 = vsyncadd %s2565, %s2573
          %s2575 = smul.addr %s25, 32
          %s2576 = smul.addr %s2575, 128
          %s2577 = scalar_lea.hbm %s7, %s2576
          %s2578 = sshll.u32 %s2568, 4
          %s2579 = int_to_ptr.vmem [resolvable:$true] %s2578
          %2584 = dma.vmem_to_hbm [thread:$0]  %s2579, 4096, %s2577, %s2565, 256, 256, 16
        $region60: #{oa_forward.1} parent=47 // pred_fallthru
          _
      $region48: #{oa_forward.1} parent=5 // pred_fallthru
        _
      %p2585 = scmp.le.s32.totalorder 2, %s16
      // Predicated region
      $region61: #{oa_forward.1} parent=5 // pred_check
        %p2586 = pneg %p2585
      $region62: #{oa_forward.1} parent=5 // pred_check_branch
        %2588 = sbr.rel (%p2586) target = $region64
      $region63: #{oa_forward.1} parent=5 // pred_region
        %s2589 = ssub.s32 %s16, 2
        // Predicated region
        $region65: #{oa_forward.1} parent=63 // pred_check
          %p2590 = pneg %p209
        $region66: #{oa_forward.1} parent=63 // pred_check_branch
          %2592 = sbr.rel (%p2590) target = $region68
        $region67: #{oa_forward.1} parent=63 // pred_region
          %s2593 = sand.u32 %s194, 1
          %s2594 = scalar_lea.sflag [#allocation6], %s2593
          %s2595 = sand.u32 %s194, 1
          %s2596 = smul.addr %s2595, 256
          %s2597 = scalar_lea.vmem [#allocation5], %s2596
          %2598 = dma.done %s2594, 4096
        $region68: #{oa_forward.1} parent=63 // pred_fallthru
          _
      $region64: #{oa_forward.1} parent=5 // pred_fallthru
        _
    $region6: #{oa_forward.1} parent=1 // loop_footer
      %s20 = sadd.s32 1, %s16
    $region7: #{oa_forward.1} parent=1 // loop_footer_branch
      %15 = sbr.rel target = $region3
    $region8: #{oa_forward.1} parent=1 // loop_exit
      _
    %2599 = vsyncpa [#allocation6], 1
    %s2600 = scalar_lea.sflag [#allocation6], 1
    %2601 = vsyncpa %s2600, 1

</llo_original>
